<compile_context>
chip_gen: v7x
topology: tpu7x:2x2x1
jax: 0.10.0
libtpu: 0.0.40
codegen_flags: <defaults>
</compile_context>

<pallas_src>
import functools

import jax
import jax.numpy as jnp
from jax import lax
from jax.experimental import pallas as pl
from jax.experimental.pallas import tpu as pltpu


def _gru_chunk_kernel(gi_r_ref, gi_z_ref, gi_n_ref,
                      whh_r_ref, whh_z_ref, whh_n_ref,
                      bhh_r_ref, bhh_z_ref, bhh_n_ref,
                      out_ref, h_scratch, *, chunk, unroll):
    """One grid step = one chunk of `chunk` GRU timesteps (gate order r,z,n)."""
    c = pl.program_id(0)

    @pl.when(c == 0)
    def _():
        # self.hidden = zeros(1, batch, hidden_dim)
        h_scratch[...] = jnp.zeros_like(h_scratch)

    # Hoist weight / bias loads out of the time loop.
    wr = whh_r_ref[...]
    wz = whh_z_ref[...]
    wn = whh_n_ref[...]
    br = bhh_r_ref[...]
    bz = bhh_z_ref[...]
    bn = bhh_n_ref[...]

    def step(t, h):
        # Only the hidden projection is sequential.  Per-gate (B,H)@(H,H)
        # dots with pre-transposed weights: no in-kernel transpose and no
        # slicing of a fused 3H lane dimension.
        gh_r = jnp.dot(h, wr, preferred_element_type=jnp.float32) + br
        gh_z = jnp.dot(h, wz, preferred_element_type=jnp.float32) + bz
        gh_n = jnp.dot(h, wn, preferred_element_type=jnp.float32) + bn
        r = jax.nn.sigmoid(gi_r_ref[t] + gh_r)
        z = jax.nn.sigmoid(gi_z_ref[t] + gh_z)
        n = jnp.tanh(gi_n_ref[t] + r * gh_n)
        h_new = (1.0 - z) * n + z * h
        out_ref[t] = h_new.astype(out_ref.dtype)
        return h_new

    h_scratch[...] = lax.fori_loop(0, chunk, step, h_scratch[...],
                                   unroll=unroll)


def gru_sentiment_forward(sentence, params, *, hidden_dim, label_size,
                          seq_chunk=128):
    """sentence: (S, B) int32 token ids.  Returns (y, gru_out, x)."""
    S, B = sentence.shape
    emb = params["embedding"]                      # (V, E)
    E = emb.shape[1]
    H = hidden_dim
    L = label_size

    # Embedding lookup (data-dependent gather -> XLA glue): (S, B, E)
    x = emb[sentence].astype(jnp.float32)

    # ---- input projection hoisted out of the recurrence: one fat matmul ----
    wih = params["w_ih"]                           # (3H, E)
    bih = params["b_ih"]                           # (3H,)
    gi = (x.reshape(S * B, E) @ wih.T + bih).reshape(S, B, 3 * H)
    gi_r = gi[:, :, 0:H]                           # (S, B, H) each, b_ih folded in
    gi_z = gi[:, :, H:2 * H]
    gi_n = gi[:, :, 2 * H:3 * H]

    # ---- pre-transpose + per-gate split of the recurrent weights ----------
    whh = params["w_hh"]                           # (3H, H)
    whh_r = whh[0:H, :].T                          # (H, H) contraction-major
    whh_z = whh[H:2 * H, :].T
    whh_n = whh[2 * H:3 * H, :].T
    bhh = params["b_hh"]
    bhh_r = bhh[0:H].reshape(1, H)
    bhh_z = bhh[H:2 * H].reshape(1, H)
    bhh_n = bhh[2 * H:3 * H].reshape(1, H)

    # ---- chunk the sequence so long S stays within the VMEM budget --------
    T = min(S, seq_chunk)
    n_chunks = pl.cdiv(S, T)
    S_pad = n_chunks * T
    if S_pad != S:
        # Zero-padded trailing steps only affect rows >= S, which are sliced
        # off below (the recurrence only flows forward in time).
        pad = ((0, S_pad - S), (0, 0), (0, 0))
        gi_r = jnp.pad(gi_r, pad)
        gi_z = jnp.pad(gi_z, pad)
        gi_n = jnp.pad(gi_n, pad)

    unroll = T if T <= 16 else 8
    kernel = functools.partial(_gru_chunk_kernel, chunk=T, unroll=unroll)

    gru_out = pl.pallas_call(
        kernel,
        out_shape=jax.ShapeDtypeStruct((S_pad, B, H), jnp.float32),
        grid_spec=pltpu.PrefetchScalarGridSpec(
            num_scalar_prefetch=0,
            grid=(n_chunks,),
            in_specs=[
                pl.BlockSpec((T, B, H), lambda c: (c, 0, 0)),   # gi_r chunk
                pl.BlockSpec((T, B, H), lambda c: (c, 0, 0)),   # gi_z chunk
                pl.BlockSpec((T, B, H), lambda c: (c, 0, 0)),   # gi_n chunk
                pl.BlockSpec((H, H), lambda c: (0, 0)),         # W_hh_r^T
                pl.BlockSpec((H, H), lambda c: (0, 0)),         # W_hh_z^T
                pl.BlockSpec((H, H), lambda c: (0, 0)),         # W_hh_n^T
                pl.BlockSpec((1, H), lambda c: (0, 0)),         # b_hh_r
                pl.BlockSpec((1, H), lambda c: (0, 0)),         # b_hh_z
                pl.BlockSpec((1, H), lambda c: (0, 0)),         # b_hh_n
            ],
            out_specs=pl.BlockSpec((T, B, H), lambda c: (c, 0, 0)),
            scratch_shapes=[pltpu.VMEM((B, H), jnp.float32)],   # carried hidden
        ),
        compiler_params=pltpu.CompilerParams(
            dimension_semantics=("arbitrary",)),   # sequential recurrence
    )(gi_r, gi_z, gi_n, whh_r, whh_z, whh_n, bhh_r, bhh_z, bhh_n)

    gru_out = gru_out[:S]

    # hidden2label on gru_out[-1]: tiny (B,H)@(H,L), done in the wrapper.
    y = gru_out[-1] @ params["w_label"].T + params["b_label"]
    return y, gru_out, x


def _reference_forward(sentence, params, *, hidden_dim, label_size):
    """Pure-JAX reference matching torch.nn.GRU semantics."""
    H = hidden_dim
    x = params["embedding"][sentence]              # (S, B, E)
    wih, whh = params["w_ih"], params["w_hh"]
    bih, bhh = params["b_ih"], params["b_hh"]

    def step(h, x_t):
        gi = x_t @ wih.T + bih
        gh = h @ whh.T + bhh
        r = jax.nn.sigmoid(gi[:, :H] + gh[:, :H])
        z = jax.nn.sigmoid(gi[:, H:2 * H] + gh[:, H:2 * H])
        n = jnp.tanh(gi[:, 2 * H:] + r * gh[:, 2 * H:])
        h_new = (1.0 - z) * n + z * h
        return h_new, h_new

    B = sentence.shape[1]
    h0 = jnp.zeros((B, H), jnp.float32)
    _, gru_out = lax.scan(step, h0, x)
    y = gru_out[-1] @ params["w_label"].T + params["b_label"]
    return y, gru_out, x


def _init_params(key, vocab_size, embedding_dim, hidden_dim, label_size):
    ks = jax.random.split(key, 7)
    s = 0.1
    return {
        "embedding": jax.random.normal(ks[0], (vocab_size, embedding_dim), jnp.float32) * s,
        "w_ih": jax.random.normal(ks[1], (3 * hidden_dim, embedding_dim), jnp.float32) * s,
        "w_hh": jax.random.normal(ks[2], (3 * hidden_dim, hidden_dim), jnp.float32) * s,
        "b_ih": jax.random.normal(ks[3], (3 * hidden_dim,), jnp.float32) * s,
        "b_hh": jax.random.normal(ks[4], (3 * hidden_dim,), jnp.float32) * s,
        "w_label": jax.random.normal(ks[5], (label_size, hidden_dim), jnp.float32) * s,
        "b_label": jax.random.normal(ks[6], (label_size,), jnp.float32) * s,
    }


if __name__ == "__main__":
    # Small, deterministic config consistent with the module's forward.
    SEQ_LEN, BATCH = 8, 4
    VOCAB, EMB_DIM, HIDDEN, LABELS = 50, 32, 32, 4

    key = jax.random.PRNGKey(0)
    k_param, k_tok = jax.random.split(key)
    params = _init_params(k_param, VOCAB, EMB_DIM, HIDDEN, LABELS)
    sentence = jax.random.randint(k_tok, (SEQ_LEN, BATCH), 0, VOCAB, jnp.int32)

    y, gru_out, x = gru_sentiment_forward(
        sentence, params, hidden_dim=HIDDEN, label_size=LABELS)
    jax.block_until_ready((y, gru_out, x))

    y_ref, gru_ref, x_ref = _reference_forward(
        sentence, params, hidden_dim=HIDDEN, label_size=LABELS)

    assert y.shape == (BATCH, LABELS)
    assert gru_out.shape == (SEQ_LEN, BATCH, HIDDEN)
    assert x.shape == (SEQ_LEN, BATCH, EMB_DIM)
    assert jnp.allclose(x, x_ref, atol=2e-5)
    assert jnp.allclose(gru_out, gru_ref, atol=2e-5)
    assert jnp.allclose(y, y_ref, atol=2e-5)

    print("KERNEL_OK")
</pallas_src>

<mosaic_0001>
module attributes {stable_mosaic.version = 11 : i64} {
  func.func @_gru_chunk_kernel(%arg0: i32, %arg1: memref<8x4x32xf32, #tpu.memory_space<vmem>>, %arg2: memref<8x4x32xf32, #tpu.memory_space<vmem>>, %arg3: memref<8x4x32xf32, #tpu.memory_space<vmem>>, %arg4: memref<32x32xf32, #tpu.memory_space<vmem>>, %arg5: memref<32x32xf32, #tpu.memory_space<vmem>>, %arg6: memref<32x32xf32, #tpu.memory_space<vmem>>, %arg7: memref<1x32xf32, #tpu.memory_space<vmem>>, %arg8: memref<1x32xf32, #tpu.memory_space<vmem>>, %arg9: memref<1x32xf32, #tpu.memory_space<vmem>>, %arg10: memref<8x4x32xf32, #tpu.memory_space<vmem>>, %arg11: memref<4x32xf32, #tpu.memory_space<vmem>>) attributes {dimension_semantics = [#tpu.dimension_semantics<arbitrary>], iteration_bounds = array<i64: 1>, scalar_prefetch = 0 : i64, scratch_operands = 1 : i64, tpu.core_type = #tpu.core_type<tc>, window_params = [{transform_indices = @transform_0, window_bounds = array<i64: 8, 4, 32>}, {transform_indices = @transform_1, window_bounds = array<i64: 8, 4, 32>}, {transform_indices = @transform_2, window_bounds = array<i64: 8, 4, 32>}, {pipeline_mode = #tpu.pipeline_mode<synchronous>, transform_indices = @transform_3, window_bounds = array<i64: 32, 32>}, {pipeline_mode = #tpu.pipeline_mode<synchronous>, transform_indices = @transform_4, window_bounds = array<i64: 32, 32>}, {pipeline_mode = #tpu.pipeline_mode<synchronous>, transform_indices = @transform_5, window_bounds = array<i64: 32, 32>}, {pipeline_mode = #tpu.pipeline_mode<synchronous>, transform_indices = @transform_6, window_bounds = array<i64: 1, 32>}, {pipeline_mode = #tpu.pipeline_mode<synchronous>, transform_indices = @transform_7, window_bounds = array<i64: 1, 32>}, {pipeline_mode = #tpu.pipeline_mode<synchronous>, transform_indices = @transform_8, window_bounds = array<i64: 1, 32>}, {transform_indices = @transform_9, window_bounds = array<i64: 8, 4, 32>}]} {
    %c0_i32 = arith.constant 0 : i32
    %0 = arith.cmpi eq, %arg0, %c0_i32 : i32
    %1 = arith.extui %0 : i1 to i32
    %c0_i32_0 = arith.constant 0 : i32
    %2 = arith.cmpi ne, %1, %c0_i32_0 : i32
    scf.if %2 {
      %cst_128 = arith.constant 0.000000e+00 : f32
      %347 = vector.broadcast %cst_128 : f32 to vector<4x32xf32>
      %c0_129 = arith.constant 0 : index
      %c0_130 = arith.constant 0 : index
      %348 = vector.load %arg11[%c0_129, %c0_130] : memref<4x32xf32, #tpu.memory_space<vmem>>, vector<4x32xf32>
      tpu.vector_store %arg11[%c0_129, %c0_130], %347 {strides = array<i32>} : memref<4x32xf32, #tpu.memory_space<vmem>>, vector<4x32xf32>,
    } else {
    }
    %c0 = arith.constant 0 : index
    %c0_1 = arith.constant 0 : index
    %3 = vector.load %arg4[%c0, %c0_1] : memref<32x32xf32, #tpu.memory_space<vmem>>, vector<32x32xf32>
    %c0_2 = arith.constant 0 : index
    %c0_3 = arith.constant 0 : index
    %4 = vector.load %arg5[%c0_2, %c0_3] : memref<32x32xf32, #tpu.memory_space<vmem>>, vector<32x32xf32>
    %c0_4 = arith.constant 0 : index
    %c0_5 = arith.constant 0 : index
    %5 = vector.load %arg6[%c0_4, %c0_5] : memref<32x32xf32, #tpu.memory_space<vmem>>, vector<32x32xf32>
    %c0_6 = arith.constant 0 : index
    %c0_7 = arith.constant 0 : index
    %6 = vector.load %arg7[%c0_6, %c0_7] : memref<1x32xf32, #tpu.memory_space<vmem>>, vector<1x32xf32>
    %c0_8 = arith.constant 0 : index
    %c0_9 = arith.constant 0 : index
    %7 = vector.load %arg8[%c0_8, %c0_9] : memref<1x32xf32, #tpu.memory_space<vmem>>, vector<1x32xf32>
    %c0_10 = arith.constant 0 : index
    %c0_11 = arith.constant 0 : index
    %8 = vector.load %arg9[%c0_10, %c0_11] : memref<1x32xf32, #tpu.memory_space<vmem>>, vector<1x32xf32>
    %c0_12 = arith.constant 0 : index
    %c0_13 = arith.constant 0 : index
    %9 = vector.load %arg11[%c0_12, %c0_13] : memref<4x32xf32, #tpu.memory_space<vmem>>, vector<4x32xf32>
    %c0_i32_14 = arith.constant 0 : i32
    %cst = arith.constant dense<0.000000e+00> : vector<4x32xf32>
    %10 = tpu.matmul %9, %3, %cst {dimension_numbers = #tpu.dot_dimension_numbers<[1], [0], [0], [1], [0, 0, 1, 1], [], []>} : vector<4x32xf32>, vector<32x32xf32>, vector<4x32xf32> -> vector<4x32xf32>
    %11 = vector.broadcast %6 : vector<1x32xf32> to vector<4x32xf32>
    %12 = arith.addf %10, %11 : vector<4x32xf32>
    %cst_15 = arith.constant dense<0.000000e+00> : vector<4x32xf32>
    %13 = tpu.matmul %9, %4, %cst_15 {dimension_numbers = #tpu.dot_dimension_numbers<[1], [0], [0], [1], [0, 0, 1, 1], [], []>} : vector<4x32xf32>, vector<32x32xf32>, vector<4x32xf32> -> vector<4x32xf32>
    %14 = vector.broadcast %7 : vector<1x32xf32> to vector<4x32xf32>
    %15 = arith.addf %13, %14 : vector<4x32xf32>
    %cst_16 = arith.constant dense<0.000000e+00> : vector<4x32xf32>
    %16 = tpu.matmul %9, %5, %cst_16 {dimension_numbers = #tpu.dot_dimension_numbers<[1], [0], [0], [1], [0, 0, 1, 1], [], []>} : vector<4x32xf32>, vector<32x32xf32>, vector<4x32xf32> -> vector<4x32xf32>
    %17 = vector.broadcast %8 : vector<1x32xf32> to vector<4x32xf32>
    %18 = arith.addf %16, %17 : vector<4x32xf32>
    %19 = arith.index_cast %c0_i32_14 : i32 to index
    %c0_17 = arith.constant 0 : index
    %c0_18 = arith.constant 0 : index
    %20 = vector.load %arg1[%19, %c0_17, %c0_18] : memref<8x4x32xf32, #tpu.memory_space<vmem>>, vector<1x4x32xf32>
    %21 = vector.shape_cast %20 : vector<1x4x32xf32> to vector<4x32xf32>
    %22 = arith.addf %21, %12 : vector<4x32xf32>
    %23 = arith.negf %22 : vector<4x32xf32>
    %24 = math.exp %23 : vector<4x32xf32>
    %cst_19 = arith.constant 1.000000e+00 : f32
    %25 = vector.broadcast %cst_19 : f32 to vector<4x32xf32>
    %26 = arith.addf %25, %24 : vector<4x32xf32>
    %27 = arith.divf %25, %26 : vector<4x32xf32>
    %28 = arith.index_cast %c0_i32_14 : i32 to index
    %c0_20 = arith.constant 0 : index
    %c0_21 = arith.constant 0 : index
    %29 = vector.load %arg2[%28, %c0_20, %c0_21] : memref<8x4x32xf32, #tpu.memory_space<vmem>>, vector<1x4x32xf32>
    %30 = vector.shape_cast %29 : vector<1x4x32xf32> to vector<4x32xf32>
    %31 = arith.addf %30, %15 : vector<4x32xf32>
    %32 = arith.negf %31 : vector<4x32xf32>
    %33 = math.exp %32 : vector<4x32xf32>
    %cst_22 = arith.constant 1.000000e+00 : f32
    %34 = vector.broadcast %cst_22 : f32 to vector<4x32xf32>
    %35 = arith.addf %34, %33 : vector<4x32xf32>
    %36 = arith.divf %34, %35 : vector<4x32xf32>
    %37 = arith.index_cast %c0_i32_14 : i32 to index
    %c0_23 = arith.constant 0 : index
    %c0_24 = arith.constant 0 : index
    %38 = vector.load %arg3[%37, %c0_23, %c0_24] : memref<8x4x32xf32, #tpu.memory_space<vmem>>, vector<1x4x32xf32>
    %39 = vector.shape_cast %38 : vector<1x4x32xf32> to vector<4x32xf32>
    %40 = arith.mulf %27, %18 : vector<4x32xf32>
    %41 = arith.addf %39, %40 : vector<4x32xf32>
    %42 = math.tanh %41 : vector<4x32xf32>
    %cst_25 = arith.constant 1.000000e+00 : f32
    %43 = vector.broadcast %cst_25 : f32 to vector<4x32xf32>
    %44 = arith.subf %43, %36 : vector<4x32xf32>
    %45 = arith.mulf %44, %42 : vector<4x32xf32>
    %46 = arith.mulf %36, %9 : vector<4x32xf32>
    %47 = arith.addf %45, %46 : vector<4x32xf32>
    %48 = arith.index_cast %c0_i32_14 : i32 to index
    %c0_26 = arith.constant 0 : index
    %c0_27 = arith.constant 0 : index
    %49 = vector.load %arg10[%48, %c0_26, %c0_27] : memref<8x4x32xf32, #tpu.memory_space<vmem>>, vector<1x4x32xf32>
    %50 = vector.shape_cast %49 : vector<1x4x32xf32> to vector<4x32xf32>
    %51 = vector.shape_cast %47 : vector<4x32xf32> to vector<1x4x32xf32>
    tpu.vector_store %arg10[%48, %c0_26, %c0_27], %51 {strides = array<i32>} : memref<8x4x32xf32, #tpu.memory_space<vmem>>, vector<1x4x32xf32>,
    %c1_i32 = arith.constant 1 : i32
    %cst_28 = arith.constant dense<0.000000e+00> : vector<4x32xf32>
    %52 = tpu.matmul %47, %3, %cst_28 {dimension_numbers = #tpu.dot_dimension_numbers<[1], [0], [0], [1], [0, 0, 1, 1], [], []>} : vector<4x32xf32>, vector<32x32xf32>, vector<4x32xf32> -> vector<4x32xf32>
    %53 = vector.broadcast %6 : vector<1x32xf32> to vector<4x32xf32>
    %54 = arith.addf %52, %53 : vector<4x32xf32>
    %cst_29 = arith.constant dense<0.000000e+00> : vector<4x32xf32>
    %55 = tpu.matmul %47, %4, %cst_29 {dimension_numbers = #tpu.dot_dimension_numbers<[1], [0], [0], [1], [0, 0, 1, 1], [], []>} : vector<4x32xf32>, vector<32x32xf32>, vector<4x32xf32> -> vector<4x32xf32>
    %56 = vector.broadcast %7 : vector<1x32xf32> to vector<4x32xf32>
    %57 = arith.addf %55, %56 : vector<4x32xf32>
    %cst_30 = arith.constant dense<0.000000e+00> : vector<4x32xf32>
    %58 = tpu.matmul %47, %5, %cst_30 {dimension_numbers = #tpu.dot_dimension_numbers<[1], [0], [0], [1], [0, 0, 1, 1], [], []>} : vector<4x32xf32>, vector<32x32xf32>, vector<4x32xf32> -> vector<4x32xf32>
    %59 = vector.broadcast %8 : vector<1x32xf32> to vector<4x32xf32>
    %60 = arith.addf %58, %59 : vector<4x32xf32>
    %61 = arith.index_cast %c1_i32 : i32 to index
    %c0_31 = arith.constant 0 : index
    %c0_32 = arith.constant 0 : index
    %62 = vector.load %arg1[%61, %c0_31, %c0_32] : memref<8x4x32xf32, #tpu.memory_space<vmem>>, vector<1x4x32xf32>
    %63 = vector.shape_cast %62 : vector<1x4x32xf32> to vector<4x32xf32>
    %64 = arith.addf %63, %54 : vector<4x32xf32>
    %65 = arith.negf %64 : vector<4x32xf32>
    %66 = math.exp %65 : vector<4x32xf32>
    %cst_33 = arith.constant 1.000000e+00 : f32
    %67 = vector.broadcast %cst_33 : f32 to vector<4x32xf32>
    %68 = arith.addf %67, %66 : vector<4x32xf32>
    %69 = arith.divf %67, %68 : vector<4x32xf32>
    %70 = arith.index_cast %c1_i32 : i32 to index
    %c0_34 = arith.constant 0 : index
    %c0_35 = arith.constant 0 : index
    %71 = vector.load %arg2[%70, %c0_34, %c0_35] : memref<8x4x32xf32, #tpu.memory_space<vmem>>, vector<1x4x32xf32>
    %72 = vector.shape_cast %71 : vector<1x4x32xf32> to vector<4x32xf32>
    %73 = arith.addf %72, %57 : vector<4x32xf32>
    %74 = arith.negf %73 : vector<4x32xf32>
    %75 = math.exp %74 : vector<4x32xf32>
    %cst_36 = arith.constant 1.000000e+00 : f32
    %76 = vector.broadcast %cst_36 : f32 to vector<4x32xf32>
    %77 = arith.addf %76, %75 : vector<4x32xf32>
    %78 = arith.divf %76, %77 : vector<4x32xf32>
    %79 = arith.index_cast %c1_i32 : i32 to index
    %c0_37 = arith.constant 0 : index
    %c0_38 = arith.constant 0 : index
    %80 = vector.load %arg3[%79, %c0_37, %c0_38] : memref<8x4x32xf32, #tpu.memory_space<vmem>>, vector<1x4x32xf32>
    %81 = vector.shape_cast %80 : vector<1x4x32xf32> to vector<4x32xf32>
    %82 = arith.mulf %69, %60 : vector<4x32xf32>
    %83 = arith.addf %81, %82 : vector<4x32xf32>
    %84 = math.tanh %83 : vector<4x32xf32>
    %cst_39 = arith.constant 1.000000e+00 : f32
    %85 = vector.broadcast %cst_39 : f32 to vector<4x32xf32>
    %86 = arith.subf %85, %78 : vector<4x32xf32>
    %87 = arith.mulf %86, %84 : vector<4x32xf32>
    %88 = arith.mulf %78, %47 : vector<4x32xf32>
    %89 = arith.addf %87, %88 : vector<4x32xf32>
    %90 = arith.index_cast %c1_i32 : i32 to index
    %c0_40 = arith.constant 0 : index
    %c0_41 = arith.constant 0 : index
    %91 = vector.load %arg10[%90, %c0_40, %c0_41] : memref<8x4x32xf32, #tpu.memory_space<vmem>>, vector<1x4x32xf32>
    %92 = vector.shape_cast %91 : vector<1x4x32xf32> to vector<4x32xf32>
    %93 = vector.shape_cast %89 : vector<4x32xf32> to vector<1x4x32xf32>
    tpu.vector_store %arg10[%90, %c0_40, %c0_41], %93 {strides = array<i32>} : memref<8x4x32xf32, #tpu.memory_space<vmem>>, vector<1x4x32xf32>,
    %c2_i32 = arith.constant 2 : i32
    %cst_42 = arith.constant dense<0.000000e+00> : vector<4x32xf32>
    %94 = tpu.matmul %89, %3, %cst_42 {dimension_numbers = #tpu.dot_dimension_numbers<[1], [0], [0], [1], [0, 0, 1, 1], [], []>} : vector<4x32xf32>, vector<32x32xf32>, vector<4x32xf32> -> vector<4x32xf32>
    %95 = vector.broadcast %6 : vector<1x32xf32> to vector<4x32xf32>
    %96 = arith.addf %94, %95 : vector<4x32xf32>
    %cst_43 = arith.constant dense<0.000000e+00> : vector<4x32xf32>
    %97 = tpu.matmul %89, %4, %cst_43 {dimension_numbers = #tpu.dot_dimension_numbers<[1], [0], [0], [1], [0, 0, 1, 1], [], []>} : vector<4x32xf32>, vector<32x32xf32>, vector<4x32xf32> -> vector<4x32xf32>
    %98 = vector.broadcast %7 : vector<1x32xf32> to vector<4x32xf32>
    %99 = arith.addf %97, %98 : vector<4x32xf32>
    %cst_44 = arith.constant dense<0.000000e+00> : vector<4x32xf32>
    %100 = tpu.matmul %89, %5, %cst_44 {dimension_numbers = #tpu.dot_dimension_numbers<[1], [0], [0], [1], [0, 0, 1, 1], [], []>} : vector<4x32xf32>, vector<32x32xf32>, vector<4x32xf32> -> vector<4x32xf32>
    %101 = vector.broadcast %8 : vector<1x32xf32> to vector<4x32xf32>
    %102 = arith.addf %100, %101 : vector<4x32xf32>
    %103 = arith.index_cast %c2_i32 : i32 to index
    %c0_45 = arith.constant 0 : index
    %c0_46 = arith.constant 0 : index
    %104 = vector.load %arg1[%103, %c0_45, %c0_46] : memref<8x4x32xf32, #tpu.memory_space<vmem>>, vector<1x4x32xf32>
    %105 = vector.shape_cast %104 : vector<1x4x32xf32> to vector<4x32xf32>
    %106 = arith.addf %105, %96 : vector<4x32xf32>
    %107 = arith.negf %106 : vector<4x32xf32>
    %108 = math.exp %107 : vector<4x32xf32>
    %cst_47 = arith.constant 1.000000e+00 : f32
    %109 = vector.broadcast %cst_47 : f32 to vector<4x32xf32>
    %110 = arith.addf %109, %108 : vector<4x32xf32>
    %111 = arith.divf %109, %110 : vector<4x32xf32>
    %112 = arith.index_cast %c2_i32 : i32 to index
    %c0_48 = arith.constant 0 : index
    %c0_49 = arith.constant 0 : index
    %113 = vector.load %arg2[%112, %c0_48, %c0_49] : memref<8x4x32xf32, #tpu.memory_space<vmem>>, vector<1x4x32xf32>
    %114 = vector.shape_cast %113 : vector<1x4x32xf32> to vector<4x32xf32>
    %115 = arith.addf %114, %99 : vector<4x32xf32>
    %116 = arith.negf %115 : vector<4x32xf32>
    %117 = math.exp %116 : vector<4x32xf32>
    %cst_50 = arith.constant 1.000000e+00 : f32
    %118 = vector.broadcast %cst_50 : f32 to vector<4x32xf32>
    %119 = arith.addf %118, %117 : vector<4x32xf32>
    %120 = arith.divf %118, %119 : vector<4x32xf32>
    %121 = arith.index_cast %c2_i32 : i32 to index
    %c0_51 = arith.constant 0 : index
    %c0_52 = arith.constant 0 : index
    %122 = vector.load %arg3[%121, %c0_51, %c0_52] : memref<8x4x32xf32, #tpu.memory_space<vmem>>, vector<1x4x32xf32>
    %123 = vector.shape_cast %122 : vector<1x4x32xf32> to vector<4x32xf32>
    %124 = arith.mulf %111, %102 : vector<4x32xf32>
    %125 = arith.addf %123, %124 : vector<4x32xf32>
    %126 = math.tanh %125 : vector<4x32xf32>
    %cst_53 = arith.constant 1.000000e+00 : f32
    %127 = vector.broadcast %cst_53 : f32 to vector<4x32xf32>
    %128 = arith.subf %127, %120 : vector<4x32xf32>
    %129 = arith.mulf %128, %126 : vector<4x32xf32>
    %130 = arith.mulf %120, %89 : vector<4x32xf32>
    %131 = arith.addf %129, %130 : vector<4x32xf32>
    %132 = arith.index_cast %c2_i32 : i32 to index
    %c0_54 = arith.constant 0 : index
    %c0_55 = arith.constant 0 : index
    %133 = vector.load %arg10[%132, %c0_54, %c0_55] : memref<8x4x32xf32, #tpu.memory_space<vmem>>, vector<1x4x32xf32>
    %134 = vector.shape_cast %133 : vector<1x4x32xf32> to vector<4x32xf32>
    %135 = vector.shape_cast %131 : vector<4x32xf32> to vector<1x4x32xf32>
    tpu.vector_store %arg10[%132, %c0_54, %c0_55], %135 {strides = array<i32>} : memref<8x4x32xf32, #tpu.memory_space<vmem>>, vector<1x4x32xf32>,
    %c3_i32 = arith.constant 3 : i32
    %cst_56 = arith.constant dense<0.000000e+00> : vector<4x32xf32>
    %136 = tpu.matmul %131, %3, %cst_56 {dimension_numbers = #tpu.dot_dimension_numbers<[1], [0], [0], [1], [0, 0, 1, 1], [], []>} : vector<4x32xf32>, vector<32x32xf32>, vector<4x32xf32> -> vector<4x32xf32>
    %137 = vector.broadcast %6 : vector<1x32xf32> to vector<4x32xf32>
    %138 = arith.addf %136, %137 : vector<4x32xf32>
    %cst_57 = arith.constant dense<0.000000e+00> : vector<4x32xf32>
    %139 = tpu.matmul %131, %4, %cst_57 {dimension_numbers = #tpu.dot_dimension_numbers<[1], [0], [0], [1], [0, 0, 1, 1], [], []>} : vector<4x32xf32>, vector<32x32xf32>, vector<4x32xf32> -> vector<4x32xf32>
    %140 = vector.broadcast %7 : vector<1x32xf32> to vector<4x32xf32>
    %141 = arith.addf %139, %140 : vector<4x32xf32>
    %cst_58 = arith.constant dense<0.000000e+00> : vector<4x32xf32>
    %142 = tpu.matmul %131, %5, %cst_58 {dimension_numbers = #tpu.dot_dimension_numbers<[1], [0], [0], [1], [0, 0, 1, 1], [], []>} : vector<4x32xf32>, vector<32x32xf32>, vector<4x32xf32> -> vector<4x32xf32>
    %143 = vector.broadcast %8 : vector<1x32xf32> to vector<4x32xf32>
    %144 = arith.addf %142, %143 : vector<4x32xf32>
    %145 = arith.index_cast %c3_i32 : i32 to index
    %c0_59 = arith.constant 0 : index
    %c0_60 = arith.constant 0 : index
    %146 = vector.load %arg1[%145, %c0_59, %c0_60] : memref<8x4x32xf32, #tpu.memory_space<vmem>>, vector<1x4x32xf32>
    %147 = vector.shape_cast %146 : vector<1x4x32xf32> to vector<4x32xf32>
    %148 = arith.addf %147, %138 : vector<4x32xf32>
    %149 = arith.negf %148 : vector<4x32xf32>
    %150 = math.exp %149 : vector<4x32xf32>
    %cst_61 = arith.constant 1.000000e+00 : f32
    %151 = vector.broadcast %cst_61 : f32 to vector<4x32xf32>
    %152 = arith.addf %151, %150 : vector<4x32xf32>
    %153 = arith.divf %151, %152 : vector<4x32xf32>
    %154 = arith.index_cast %c3_i32 : i32 to index
    %c0_62 = arith.constant 0 : index
    %c0_63 = arith.constant 0 : index
    %155 = vector.load %arg2[%154, %c0_62, %c0_63] : memref<8x4x32xf32, #tpu.memory_space<vmem>>, vector<1x4x32xf32>
    %156 = vector.shape_cast %155 : vector<1x4x32xf32> to vector<4x32xf32>
    %157 = arith.addf %156, %141 : vector<4x32xf32>
    %158 = arith.negf %157 : vector<4x32xf32>
    %159 = math.exp %158 : vector<4x32xf32>
    %cst_64 = arith.constant 1.000000e+00 : f32
    %160 = vector.broadcast %cst_64 : f32 to vector<4x32xf32>
    %161 = arith.addf %160, %159 : vector<4x32xf32>
    %162 = arith.divf %160, %161 : vector<4x32xf32>
    %163 = arith.index_cast %c3_i32 : i32 to index
    %c0_65 = arith.constant 0 : index
    %c0_66 = arith.constant 0 : index
    %164 = vector.load %arg3[%163, %c0_65, %c0_66] : memref<8x4x32xf32, #tpu.memory_space<vmem>>, vector<1x4x32xf32>
    %165 = vector.shape_cast %164 : vector<1x4x32xf32> to vector<4x32xf32>
    %166 = arith.mulf %153, %144 : vector<4x32xf32>
    %167 = arith.addf %165, %166 : vector<4x32xf32>
    %168 = math.tanh %167 : vector<4x32xf32>
    %cst_67 = arith.constant 1.000000e+00 : f32
    %169 = vector.broadcast %cst_67 : f32 to vector<4x32xf32>
    %170 = arith.subf %169, %162 : vector<4x32xf32>
    %171 = arith.mulf %170, %168 : vector<4x32xf32>
    %172 = arith.mulf %162, %131 : vector<4x32xf32>
    %173 = arith.addf %171, %172 : vector<4x32xf32>
    %174 = arith.index_cast %c3_i32 : i32 to index
    %c0_68 = arith.constant 0 : index
    %c0_69 = arith.constant 0 : index
    %175 = vector.load %arg10[%174, %c0_68, %c0_69] : memref<8x4x32xf32, #tpu.memory_space<vmem>>, vector<1x4x32xf32>
    %176 = vector.shape_cast %175 : vector<1x4x32xf32> to vector<4x32xf32>
    %177 = vector.shape_cast %173 : vector<4x32xf32> to vector<1x4x32xf32>
    tpu.vector_store %arg10[%174, %c0_68, %c0_69], %177 {strides = array<i32>} : memref<8x4x32xf32, #tpu.memory_space<vmem>>, vector<1x4x32xf32>,
    %c4_i32 = arith.constant 4 : i32
    %cst_70 = arith.constant dense<0.000000e+00> : vector<4x32xf32>
    %178 = tpu.matmul %173, %3, %cst_70 {dimension_numbers = #tpu.dot_dimension_numbers<[1], [0], [0], [1], [0, 0, 1, 1], [], []>} : vector<4x32xf32>, vector<32x32xf32>, vector<4x32xf32> -> vector<4x32xf32>
    %179 = vector.broadcast %6 : vector<1x32xf32> to vector<4x32xf32>
    %180 = arith.addf %178, %179 : vector<4x32xf32>
    %cst_71 = arith.constant dense<0.000000e+00> : vector<4x32xf32>
    %181 = tpu.matmul %173, %4, %cst_71 {dimension_numbers = #tpu.dot_dimension_numbers<[1], [0], [0], [1], [0, 0, 1, 1], [], []>} : vector<4x32xf32>, vector<32x32xf32>, vector<4x32xf32> -> vector<4x32xf32>
    %182 = vector.broadcast %7 : vector<1x32xf32> to vector<4x32xf32>
    %183 = arith.addf %181, %182 : vector<4x32xf32>
    %cst_72 = arith.constant dense<0.000000e+00> : vector<4x32xf32>
    %184 = tpu.matmul %173, %5, %cst_72 {dimension_numbers = #tpu.dot_dimension_numbers<[1], [0], [0], [1], [0, 0, 1, 1], [], []>} : vector<4x32xf32>, vector<32x32xf32>, vector<4x32xf32> -> vector<4x32xf32>
    %185 = vector.broadcast %8 : vector<1x32xf32> to vector<4x32xf32>
    %186 = arith.addf %184, %185 : vector<4x32xf32>
    %187 = arith.index_cast %c4_i32 : i32 to index
    %c0_73 = arith.constant 0 : index
    %c0_74 = arith.constant 0 : index
    %188 = vector.load %arg1[%187, %c0_73, %c0_74] : memref<8x4x32xf32, #tpu.memory_space<vmem>>, vector<1x4x32xf32>
    %189 = vector.shape_cast %188 : vector<1x4x32xf32> to vector<4x32xf32>
    %190 = arith.addf %189, %180 : vector<4x32xf32>
    %191 = arith.negf %190 : vector<4x32xf32>
    %192 = math.exp %191 : vector<4x32xf32>
    %cst_75 = arith.constant 1.000000e+00 : f32
    %193 = vector.broadcast %cst_75 : f32 to vector<4x32xf32>
    %194 = arith.addf %193, %192 : vector<4x32xf32>
    %195 = arith.divf %193, %194 : vector<4x32xf32>
    %196 = arith.index_cast %c4_i32 : i32 to index
    %c0_76 = arith.constant 0 : index
    %c0_77 = arith.constant 0 : index
    %197 = vector.load %arg2[%196, %c0_76, %c0_77] : memref<8x4x32xf32, #tpu.memory_space<vmem>>, vector<1x4x32xf32>
    %198 = vector.shape_cast %197 : vector<1x4x32xf32> to vector<4x32xf32>
    %199 = arith.addf %198, %183 : vector<4x32xf32>
    %200 = arith.negf %199 : vector<4x32xf32>
    %201 = math.exp %200 : vector<4x32xf32>
    %cst_78 = arith.constant 1.000000e+00 : f32
    %202 = vector.broadcast %cst_78 : f32 to vector<4x32xf32>
    %203 = arith.addf %202, %201 : vector<4x32xf32>
    %204 = arith.divf %202, %203 : vector<4x32xf32>
    %205 = arith.index_cast %c4_i32 : i32 to index
    %c0_79 = arith.constant 0 : index
    %c0_80 = arith.constant 0 : index
    %206 = vector.load %arg3[%205, %c0_79, %c0_80] : memref<8x4x32xf32, #tpu.memory_space<vmem>>, vector<1x4x32xf32>
    %207 = vector.shape_cast %206 : vector<1x4x32xf32> to vector<4x32xf32>
    %208 = arith.mulf %195, %186 : vector<4x32xf32>
    %209 = arith.addf %207, %208 : vector<4x32xf32>
    %210 = math.tanh %209 : vector<4x32xf32>
    %cst_81 = arith.constant 1.000000e+00 : f32
    %211 = vector.broadcast %cst_81 : f32 to vector<4x32xf32>
    %212 = arith.subf %211, %204 : vector<4x32xf32>
    %213 = arith.mulf %212, %210 : vector<4x32xf32>
    %214 = arith.mulf %204, %173 : vector<4x32xf32>
    %215 = arith.addf %213, %214 : vector<4x32xf32>
    %216 = arith.index_cast %c4_i32 : i32 to index
    %c0_82 = arith.constant 0 : index
    %c0_83 = arith.constant 0 : index
    %217 = vector.load %arg10[%216, %c0_82, %c0_83] : memref<8x4x32xf32, #tpu.memory_space<vmem>>, vector<1x4x32xf32>
    %218 = vector.shape_cast %217 : vector<1x4x32xf32> to vector<4x32xf32>
    %219 = vector.shape_cast %215 : vector<4x32xf32> to vector<1x4x32xf32>
    tpu.vector_store %arg10[%216, %c0_82, %c0_83], %219 {strides = array<i32>} : memref<8x4x32xf32, #tpu.memory_space<vmem>>, vector<1x4x32xf32>,
    %c5_i32 = arith.constant 5 : i32
    %cst_84 = arith.constant dense<0.000000e+00> : vector<4x32xf32>
    %220 = tpu.matmul %215, %3, %cst_84 {dimension_numbers = #tpu.dot_dimension_numbers<[1], [0], [0], [1], [0, 0, 1, 1], [], []>} : vector<4x32xf32>, vector<32x32xf32>, vector<4x32xf32> -> vector<4x32xf32>
    %221 = vector.broadcast %6 : vector<1x32xf32> to vector<4x32xf32>
    %222 = arith.addf %220, %221 : vector<4x32xf32>
    %cst_85 = arith.constant dense<0.000000e+00> : vector<4x32xf32>
    %223 = tpu.matmul %215, %4, %cst_85 {dimension_numbers = #tpu.dot_dimension_numbers<[1], [0], [0], [1], [0, 0, 1, 1], [], []>} : vector<4x32xf32>, vector<32x32xf32>, vector<4x32xf32> -> vector<4x32xf32>
    %224 = vector.broadcast %7 : vector<1x32xf32> to vector<4x32xf32>
    %225 = arith.addf %223, %224 : vector<4x32xf32>
    %cst_86 = arith.constant dense<0.000000e+00> : vector<4x32xf32>
    %226 = tpu.matmul %215, %5, %cst_86 {dimension_numbers = #tpu.dot_dimension_numbers<[1], [0], [0], [1], [0, 0, 1, 1], [], []>} : vector<4x32xf32>, vector<32x32xf32>, vector<4x32xf32> -> vector<4x32xf32>
    %227 = vector.broadcast %8 : vector<1x32xf32> to vector<4x32xf32>
    %228 = arith.addf %226, %227 : vector<4x32xf32>
    %229 = arith.index_cast %c5_i32 : i32 to index
    %c0_87 = arith.constant 0 : index
    %c0_88 = arith.constant 0 : index
    %230 = vector.load %arg1[%229, %c0_87, %c0_88] : memref<8x4x32xf32, #tpu.memory_space<vmem>>, vector<1x4x32xf32>
    %231 = vector.shape_cast %230 : vector<1x4x32xf32> to vector<4x32xf32>
    %232 = arith.addf %231, %222 : vector<4x32xf32>
    %233 = arith.negf %232 : vector<4x32xf32>
    %234 = math.exp %233 : vector<4x32xf32>
    %cst_89 = arith.constant 1.000000e+00 : f32
    %235 = vector.broadcast %cst_89 : f32 to vector<4x32xf32>
    %236 = arith.addf %235, %234 : vector<4x32xf32>
    %237 = arith.divf %235, %236 : vector<4x32xf32>
    %238 = arith.index_cast %c5_i32 : i32 to index
    %c0_90 = arith.constant 0 : index
    %c0_91 = arith.constant 0 : index
    %239 = vector.load %arg2[%238, %c0_90, %c0_91] : memref<8x4x32xf32, #tpu.memory_space<vmem>>, vector<1x4x32xf32>
    %240 = vector.shape_cast %239 : vector<1x4x32xf32> to vector<4x32xf32>
    %241 = arith.addf %240, %225 : vector<4x32xf32>
    %242 = arith.negf %241 : vector<4x32xf32>
    %243 = math.exp %242 : vector<4x32xf32>
    %cst_92 = arith.constant 1.000000e+00 : f32
    %244 = vector.broadcast %cst_92 : f32 to vector<4x32xf32>
    %245 = arith.addf %244, %243 : vector<4x32xf32>
    %246 = arith.divf %244, %245 : vector<4x32xf32>
    %247 = arith.index_cast %c5_i32 : i32 to index
    %c0_93 = arith.constant 0 : index
    %c0_94 = arith.constant 0 : index
    %248 = vector.load %arg3[%247, %c0_93, %c0_94] : memref<8x4x32xf32, #tpu.memory_space<vmem>>, vector<1x4x32xf32>
    %249 = vector.shape_cast %248 : vector<1x4x32xf32> to vector<4x32xf32>
    %250 = arith.mulf %237, %228 : vector<4x32xf32>
    %251 = arith.addf %249, %250 : vector<4x32xf32>
    %252 = math.tanh %251 : vector<4x32xf32>
    %cst_95 = arith.constant 1.000000e+00 : f32
    %253 = vector.broadcast %cst_95 : f32 to vector<4x32xf32>
    %254 = arith.subf %253, %246 : vector<4x32xf32>
    %255 = arith.mulf %254, %252 : vector<4x32xf32>
    %256 = arith.mulf %246, %215 : vector<4x32xf32>
    %257 = arith.addf %255, %256 : vector<4x32xf32>
    %258 = arith.index_cast %c5_i32 : i32 to index
    %c0_96 = arith.constant 0 : index
    %c0_97 = arith.constant 0 : index
    %259 = vector.load %arg10[%258, %c0_96, %c0_97] : memref<8x4x32xf32, #tpu.memory_space<vmem>>, vector<1x4x32xf32>
    %260 = vector.shape_cast %259 : vector<1x4x32xf32> to vector<4x32xf32>
    %261 = vector.shape_cast %257 : vector<4x32xf32> to vector<1x4x32xf32>
    tpu.vector_store %arg10[%258, %c0_96, %c0_97], %261 {strides = array<i32>} : memref<8x4x32xf32, #tpu.memory_space<vmem>>, vector<1x4x32xf32>,
    %c6_i32 = arith.constant 6 : i32
    %cst_98 = arith.constant dense<0.000000e+00> : vector<4x32xf32>
    %262 = tpu.matmul %257, %3, %cst_98 {dimension_numbers = #tpu.dot_dimension_numbers<[1], [0], [0], [1], [0, 0, 1, 1], [], []>} : vector<4x32xf32>, vector<32x32xf32>, vector<4x32xf32> -> vector<4x32xf32>
    %263 = vector.broadcast %6 : vector<1x32xf32> to vector<4x32xf32>
    %264 = arith.addf %262, %263 : vector<4x32xf32>
    %cst_99 = arith.constant dense<0.000000e+00> : vector<4x32xf32>
    %265 = tpu.matmul %257, %4, %cst_99 {dimension_numbers = #tpu.dot_dimension_numbers<[1], [0], [0], [1], [0, 0, 1, 1], [], []>} : vector<4x32xf32>, vector<32x32xf32>, vector<4x32xf32> -> vector<4x32xf32>
    %266 = vector.broadcast %7 : vector<1x32xf32> to vector<4x32xf32>
    %267 = arith.addf %265, %266 : vector<4x32xf32>
    %cst_100 = arith.constant dense<0.000000e+00> : vector<4x32xf32>
    %268 = tpu.matmul %257, %5, %cst_100 {dimension_numbers = #tpu.dot_dimension_numbers<[1], [0], [0], [1], [0, 0, 1, 1], [], []>} : vector<4x32xf32>, vector<32x32xf32>, vector<4x32xf32> -> vector<4x32xf32>
    %269 = vector.broadcast %8 : vector<1x32xf32> to vector<4x32xf32>
    %270 = arith.addf %268, %269 : vector<4x32xf32>
    %271 = arith.index_cast %c6_i32 : i32 to index
    %c0_101 = arith.constant 0 : index
    %c0_102 = arith.constant 0 : index
    %272 = vector.load %arg1[%271, %c0_101, %c0_102] : memref<8x4x32xf32, #tpu.memory_space<vmem>>, vector<1x4x32xf32>
    %273 = vector.shape_cast %272 : vector<1x4x32xf32> to vector<4x32xf32>
    %274 = arith.addf %273, %264 : vector<4x32xf32>
    %275 = arith.negf %274 : vector<4x32xf32>
    %276 = math.exp %275 : vector<4x32xf32>
    %cst_103 = arith.constant 1.000000e+00 : f32
    %277 = vector.broadcast %cst_103 : f32 to vector<4x32xf32>
    %278 = arith.addf %277, %276 : vector<4x32xf32>
    %279 = arith.divf %277, %278 : vector<4x32xf32>
    %280 = arith.index_cast %c6_i32 : i32 to index
    %c0_104 = arith.constant 0 : index
    %c0_105 = arith.constant 0 : index
    %281 = vector.load %arg2[%280, %c0_104, %c0_105] : memref<8x4x32xf32, #tpu.memory_space<vmem>>, vector<1x4x32xf32>
    %282 = vector.shape_cast %281 : vector<1x4x32xf32> to vector<4x32xf32>
    %283 = arith.addf %282, %267 : vector<4x32xf32>
    %284 = arith.negf %283 : vector<4x32xf32>
    %285 = math.exp %284 : vector<4x32xf32>
    %cst_106 = arith.constant 1.000000e+00 : f32
    %286 = vector.broadcast %cst_106 : f32 to vector<4x32xf32>
    %287 = arith.addf %286, %285 : vector<4x32xf32>
    %288 = arith.divf %286, %287 : vector<4x32xf32>
    %289 = arith.index_cast %c6_i32 : i32 to index
    %c0_107 = arith.constant 0 : index
    %c0_108 = arith.constant 0 : index
    %290 = vector.load %arg3[%289, %c0_107, %c0_108] : memref<8x4x32xf32, #tpu.memory_space<vmem>>, vector<1x4x32xf32>
    %291 = vector.shape_cast %290 : vector<1x4x32xf32> to vector<4x32xf32>
    %292 = arith.mulf %279, %270 : vector<4x32xf32>
    %293 = arith.addf %291, %292 : vector<4x32xf32>
    %294 = math.tanh %293 : vector<4x32xf32>
    %cst_109 = arith.constant 1.000000e+00 : f32
    %295 = vector.broadcast %cst_109 : f32 to vector<4x32xf32>
    %296 = arith.subf %295, %288 : vector<4x32xf32>
    %297 = arith.mulf %296, %294 : vector<4x32xf32>
    %298 = arith.mulf %288, %257 : vector<4x32xf32>
    %299 = arith.addf %297, %298 : vector<4x32xf32>
    %300 = arith.index_cast %c6_i32 : i32 to index
    %c0_110 = arith.constant 0 : index
    %c0_111 = arith.constant 0 : index
    %301 = vector.load %arg10[%300, %c0_110, %c0_111] : memref<8x4x32xf32, #tpu.memory_space<vmem>>, vector<1x4x32xf32>
    %302 = vector.shape_cast %301 : vector<1x4x32xf32> to vector<4x32xf32>
    %303 = vector.shape_cast %299 : vector<4x32xf32> to vector<1x4x32xf32>
    tpu.vector_store %arg10[%300, %c0_110, %c0_111], %303 {strides = array<i32>} : memref<8x4x32xf32, #tpu.memory_space<vmem>>, vector<1x4x32xf32>,
    %c7_i32 = arith.constant 7 : i32
    %cst_112 = arith.constant dense<0.000000e+00> : vector<4x32xf32>
    %304 = tpu.matmul %299, %3, %cst_112 {dimension_numbers = #tpu.dot_dimension_numbers<[1], [0], [0], [1], [0, 0, 1, 1], [], []>} : vector<4x32xf32>, vector<32x32xf32>, vector<4x32xf32> -> vector<4x32xf32>
    %305 = vector.broadcast %6 : vector<1x32xf32> to vector<4x32xf32>
    %306 = arith.addf %304, %305 : vector<4x32xf32>
    %cst_113 = arith.constant dense<0.000000e+00> : vector<4x32xf32>
    %307 = tpu.matmul %299, %4, %cst_113 {dimension_numbers = #tpu.dot_dimension_numbers<[1], [0], [0], [1], [0, 0, 1, 1], [], []>} : vector<4x32xf32>, vector<32x32xf32>, vector<4x32xf32> -> vector<4x32xf32>
    %308 = vector.broadcast %7 : vector<1x32xf32> to vector<4x32xf32>
    %309 = arith.addf %307, %308 : vector<4x32xf32>
    %cst_114 = arith.constant dense<0.000000e+00> : vector<4x32xf32>
    %310 = tpu.matmul %299, %5, %cst_114 {dimension_numbers = #tpu.dot_dimension_numbers<[1], [0], [0], [1], [0, 0, 1, 1], [], []>} : vector<4x32xf32>, vector<32x32xf32>, vector<4x32xf32> -> vector<4x32xf32>
    %311 = vector.broadcast %8 : vector<1x32xf32> to vector<4x32xf32>
    %312 = arith.addf %310, %311 : vector<4x32xf32>
    %313 = arith.index_cast %c7_i32 : i32 to index
    %c0_115 = arith.constant 0 : index
    %c0_116 = arith.constant 0 : index
    %314 = vector.load %arg1[%313, %c0_115, %c0_116] : memref<8x4x32xf32, #tpu.memory_space<vmem>>, vector<1x4x32xf32>
    %315 = vector.shape_cast %314 : vector<1x4x32xf32> to vector<4x32xf32>
    %316 = arith.addf %315, %306 : vector<4x32xf32>
    %317 = arith.negf %316 : vector<4x32xf32>
    %318 = math.exp %317 : vector<4x32xf32>
    %cst_117 = arith.constant 1.000000e+00 : f32
    %319 = vector.broadcast %cst_117 : f32 to vector<4x32xf32>
    %320 = arith.addf %319, %318 : vector<4x32xf32>
    %321 = arith.divf %319, %320 : vector<4x32xf32>
    %322 = arith.index_cast %c7_i32 : i32 to index
    %c0_118 = arith.constant 0 : index
    %c0_119 = arith.constant 0 : index
    %323 = vector.load %arg2[%322, %c0_118, %c0_119] : memref<8x4x32xf32, #tpu.memory_space<vmem>>, vector<1x4x32xf32>
    %324 = vector.shape_cast %323 : vector<1x4x32xf32> to vector<4x32xf32>
    %325 = arith.addf %324, %309 : vector<4x32xf32>
    %326 = arith.negf %325 : vector<4x32xf32>
    %327 = math.exp %326 : vector<4x32xf32>
    %cst_120 = arith.constant 1.000000e+00 : f32
    %328 = vector.broadcast %cst_120 : f32 to vector<4x32xf32>
    %329 = arith.addf %328, %327 : vector<4x32xf32>
    %330 = arith.divf %328, %329 : vector<4x32xf32>
    %331 = arith.index_cast %c7_i32 : i32 to index
    %c0_121 = arith.constant 0 : index
    %c0_122 = arith.constant 0 : index
    %332 = vector.load %arg3[%331, %c0_121, %c0_122] : memref<8x4x32xf32, #tpu.memory_space<vmem>>, vector<1x4x32xf32>
    %333 = vector.shape_cast %332 : vector<1x4x32xf32> to vector<4x32xf32>
    %334 = arith.mulf %321, %312 : vector<4x32xf32>
    %335 = arith.addf %333, %334 : vector<4x32xf32>
    %336 = math.tanh %335 : vector<4x32xf32>
    %cst_123 = arith.constant 1.000000e+00 : f32
    %337 = vector.broadcast %cst_123 : f32 to vector<4x32xf32>
    %338 = arith.subf %337, %330 : vector<4x32xf32>
    %339 = arith.mulf %338, %336 : vector<4x32xf32>
    %340 = arith.mulf %330, %299 : vector<4x32xf32>
    %341 = arith.addf %339, %340 : vector<4x32xf32>
    %342 = arith.index_cast %c7_i32 : i32 to index
    %c0_124 = arith.constant 0 : index
    %c0_125 = arith.constant 0 : index
    %343 = vector.load %arg10[%342, %c0_124, %c0_125] : memref<8x4x32xf32, #tpu.memory_space<vmem>>, vector<1x4x32xf32>
    %344 = vector.shape_cast %343 : vector<1x4x32xf32> to vector<4x32xf32>
    %345 = vector.shape_cast %341 : vector<4x32xf32> to vector<1x4x32xf32>
    tpu.vector_store %arg10[%342, %c0_124, %c0_125], %345 {strides = array<i32>} : memref<8x4x32xf32, #tpu.memory_space<vmem>>, vector<1x4x32xf32>,
    %c8_i32 = arith.constant 8 : i32
    %c0_126 = arith.constant 0 : index
    %c0_127 = arith.constant 0 : index
    %346 = vector.load %arg11[%c0_126, %c0_127] : memref<4x32xf32, #tpu.memory_space<vmem>>, vector<4x32xf32>
    tpu.vector_store %arg11[%c0_126, %c0_127], %341 {strides = array<i32>} : memref<4x32xf32, #tpu.memory_space<vmem>>, vector<4x32xf32>,
    return
  }
  func.func @transform_0(%arg0: i32) -> (i32, i32, i32) {
    %c0_i32 = arith.constant 0 : i32
    %c0_i32_0 = arith.constant 0 : i32
    %c0_i32_1 = arith.constant 0 : i32
    return %arg0, %c0_i32, %c0_i32_0 : i32, i32, i32
  }
  func.func @transform_1(%arg0: i32) -> (i32, i32, i32) {
    %c0_i32 = arith.constant 0 : i32
    %c0_i32_0 = arith.constant 0 : i32
    %c0_i32_1 = arith.constant 0 : i32
    return %arg0, %c0_i32, %c0_i32_0 : i32, i32, i32
  }
  func.func @transform_2(%arg0: i32) -> (i32, i32, i32) {
    %c0_i32 = arith.constant 0 : i32
    %c0_i32_0 = arith.constant 0 : i32
    %c0_i32_1 = arith.constant 0 : i32
    return %arg0, %c0_i32, %c0_i32_0 : i32, i32, i32
  }
  func.func @transform_3(%arg0: i32) -> (i32, i32) {
    %c0_i32 = arith.constant 0 : i32
    %c0_i32_0 = arith.constant 0 : i32
    %c0_i32_1 = arith.constant 0 : i32
    return %c0_i32, %c0_i32_0 : i32, i32
  }
  func.func @transform_4(%arg0: i32) -> (i32, i32) {
    %c0_i32 = arith.constant 0 : i32
    %c0_i32_0 = arith.constant 0 : i32
    %c0_i32_1 = arith.constant 0 : i32
    return %c0_i32, %c0_i32_0 : i32, i32
  }
  func.func @transform_5(%arg0: i32) -> (i32, i32) {
    %c0_i32 = arith.constant 0 : i32
    %c0_i32_0 = arith.constant 0 : i32
    %c0_i32_1 = arith.constant 0 : i32
    return %c0_i32, %c0_i32_0 : i32, i32
  }
  func.func @transform_6(%arg0: i32) -> (i32, i32) {
    %c0_i32 = arith.constant 0 : i32
    %c0_i32_0 = arith.constant 0 : i32
    %c0_i32_1 = arith.constant 0 : i32
    return %c0_i32, %c0_i32_0 : i32, i32
  }
  func.func @transform_7(%arg0: i32) -> (i32, i32) {
    %c0_i32 = arith.constant 0 : i32
    %c0_i32_0 = arith.constant 0 : i32
    %c0_i32_1 = arith.constant 0 : i32
    return %c0_i32, %c0_i32_0 : i32, i32
  }
  func.func @transform_8(%arg0: i32) -> (i32, i32) {
    %c0_i32 = arith.constant 0 : i32
    %c0_i32_0 = arith.constant 0 : i32
    %c0_i32_1 = arith.constant 0 : i32
    return %c0_i32, %c0_i32_0 : i32, i32
  }
  func.func @transform_9(%arg0: i32) -> (i32, i32, i32) {
    %c0_i32 = arith.constant 0 : i32
    %c0_i32_0 = arith.constant 0 : i32
    %c0_i32_1 = arith.constant 0 : i32
    return %arg0, %c0_i32, %c0_i32_0 : i32, i32, i32
  }
}

</mosaic_0001>

<llo_original>
// kernel: tpu_custom_call.1
$region0: #{tpu_custom_call.1}
  #allocation0 [shape = 'u32[]', space=smem, size = 0x4, offset = 0x4, fixed_abs, tag = 'smem constant byte address 0x4 - core index']
  #allocation1 [shape = 'u32[144,128]{1,0:T(1,128)}', space=vmem, size = 0x12000, scoped, tag = 'internal scratch']
  #allocation2 [shape = 'f32[4,32]{1,0:T(4,128)}', space=vmem, size = 0x800, scoped, tag = 'scratch operand']
  %s0 = inlined_call_operand.hbm [shape: f32[8,4,32], index: 0, kind: input, shape index: {}]
  %s1 = inlined_call_operand.hbm [shape: f32[8,4,32], index: 1, kind: input, shape index: {}]
  %s2 = inlined_call_operand.hbm [shape: f32[8,4,32], index: 2, kind: input, shape index: {}]
  %s3 = inlined_call_operand.hbm [shape: f32[32,32], index: 3, kind: input, shape index: {}]
  %s4 = inlined_call_operand.hbm [shape: f32[32,32], index: 4, kind: input, shape index: {}]
  %s5 = inlined_call_operand.hbm [shape: f32[32,32], index: 5, kind: input, shape index: {}]
  %s6 = inlined_call_operand.vmem [shape: f32[1,32], index: 6, kind: input, shape index: {}]
  %s7 = inlined_call_operand.vmem [shape: f32[1,32], index: 7, kind: input, shape index: {}]
  %s8 = inlined_call_operand.vmem [shape: f32[1,32], index: 8, kind: input, shape index: {}]
  %s9 = inlined_call_operand.hbm [shape: f32[8,4,32], index: 9, kind: output, shape index: {}]
  %s10 = sld [smem:[#allocation0]]
  $region74: #{tpu_custom_call.1} parent=0
    _
  %s12 = ssub.s32 1, %s10
  %s13 = scalar_select 0, %s12, %s10
  $region1: #{tpu_custom_call.1} parent=0
    #allocation3 [shape = 'u8[16384]{0}', space=vmem, size = 0x4000, scoped, tag = 'input window, operand 0, single buffered']
    #allocation4 [shape = 's32[1]{0}', space=sflag, size = 0x4, scoped, tag = 'scoped memory for tpu_custom_call.1']
    #allocation5 [shape = 's32[1]{0}', space=sflag, size = 0x4, scoped, tag = 'scoped memory for tpu_custom_call.1']
    #allocation6 [shape = 'u8[16384]{0}', space=vmem, size = 0x4000, scoped, tag = 'input window, operand 1, single buffered']
    #allocation7 [shape = 's32[1]{0}', space=sflag, size = 0x4, scoped, tag = 'scoped memory for tpu_custom_call.1']
    #allocation8 [shape = 'u8[16384]{0}', space=vmem, size = 0x4000, scoped, tag = 'input window, operand 2, single buffered']
    #allocation9 [shape = 'u8[16384]{0}', space=vmem, size = 0x4000, scoped, tag = 'input window, operand 3, single buffered']
    #allocation10 [shape = 's32[1]{0}', space=sflag, size = 0x4, scoped, tag = 'scoped memory for tpu_custom_call.1']
    #allocation11 [shape = 'u8[16384]{0}', space=vmem, size = 0x4000, scoped, tag = 'input window, operand 4, single buffered']
    #allocation12 [shape = 'u8[16384]{0}', space=vmem, size = 0x4000, scoped, tag = 'input window, operand 5, single buffered']
    #allocation13 [shape = 's32[1]{0}', space=sflag, size = 0x4, scoped, tag = 'scoped memory for tpu_custom_call.1']
    #allocation14 [shape = 'u8[16384]{0}', space=vmem, size = 0x4000, scoped, tag = 'output window, operand 0, single buffered']
    %14 = vsyncpa [#allocation4], 0
    %15 = vsyncpa [#allocation7], 0
    %16 = vsyncpa [#allocation10], 0
    %17 = vsyncpa [#allocation13], 0
    %18 = vsyncpa [#allocation5], 0
    // Predicated region
    $region2: #{tpu_custom_call.1} parent=1 // pred_check
      _
    $region3: #{tpu_custom_call.1} parent=1 // pred_check_branch
      %20 = sbr.rel (0) target = $region5
    $region4: #{tpu_custom_call.1} parent=1 // pred_region
      %s22 = ssub.s32 512, 512
      %23 = vsyncadd [#allocation4], %s22
      %s24 = sshll.u32 [#allocation3], 4
      %s25 = int_to_ptr.vmem [resolvable:$true] %s24
      %30 = dma.hbm_to_vmem [thread:$0]  %s0, 512, %s25, [#allocation4], 64, 64, 4
    $region5: #{tpu_custom_call.1} parent=1 // pred_fallthru
      _
    // Predicated region
    $region6: #{tpu_custom_call.1} parent=1 // pred_check
      _
    $region7: #{tpu_custom_call.1} parent=1 // pred_check_branch
      %32 = sbr.rel (0) target = $region9
    $region8: #{tpu_custom_call.1} parent=1 // pred_region
      %s34 = ssub.s32 512, 512
      %35 = vsyncadd [#allocation7], %s34
      %s36 = sshll.u32 [#allocation6], 4
      %s37 = int_to_ptr.vmem [resolvable:$true] %s36
      %42 = dma.hbm_to_vmem [thread:$0]  %s1, 512, %s37, [#allocation7], 64, 64, 4
    $region9: #{tpu_custom_call.1} parent=1 // pred_fallthru
      _
    // Predicated region
    $region10: #{tpu_custom_call.1} parent=1 // pred_check
      _
    $region11: #{tpu_custom_call.1} parent=1 // pred_check_branch
      %44 = sbr.rel (0) target = $region13
    $region12: #{tpu_custom_call.1} parent=1 // pred_region
      %s46 = ssub.s32 512, 512
      %47 = vsyncadd [#allocation7], %s46
      %s48 = sshll.u32 [#allocation8], 4
      %s49 = int_to_ptr.vmem [resolvable:$true] %s48
      %54 = dma.hbm_to_vmem [thread:$0]  %s2, 512, %s49, [#allocation7], 64, 64, 4
    $region13: #{tpu_custom_call.1} parent=1 // pred_fallthru
      _
    // Predicated region
    $region14: #{tpu_custom_call.1} parent=1 // pred_check
      _
    $region15: #{tpu_custom_call.1} parent=1 // pred_check_branch
      %56 = sbr.rel (0) target = $region17
    $region16: #{tpu_custom_call.1} parent=1 // pred_region
      %s58 = ssub.s32 512, 512
      %59 = vsyncadd [#allocation10], %s58
      %s60 = sshll.u32 [#allocation9], 4
      %s61 = int_to_ptr.vmem [resolvable:$true] %s60
      %66 = dma.hbm_to_vmem [thread:$0]  %s3, 512, %s61, [#allocation10], 128, 128, 8
    $region17: #{tpu_custom_call.1} parent=1 // pred_fallthru
      _
    // Predicated region
    $region18: #{tpu_custom_call.1} parent=1 // pred_check
      _
    $region19: #{tpu_custom_call.1} parent=1 // pred_check_branch
      %68 = sbr.rel (0) target = $region21
    $region20: #{tpu_custom_call.1} parent=1 // pred_region
      %s70 = ssub.s32 512, 512
      %71 = vsyncadd [#allocation10], %s70
      %s72 = sshll.u32 [#allocation11], 4
      %s73 = int_to_ptr.vmem [resolvable:$true] %s72
      %78 = dma.hbm_to_vmem [thread:$0]  %s4, 512, %s73, [#allocation10], 128, 128, 8
    $region21: #{tpu_custom_call.1} parent=1 // pred_fallthru
      _
    // Predicated region
    $region22: #{tpu_custom_call.1} parent=1 // pred_check
      _
    $region23: #{tpu_custom_call.1} parent=1 // pred_check_branch
      %80 = sbr.rel (0) target = $region25
    $region24: #{tpu_custom_call.1} parent=1 // pred_region
      %s82 = ssub.s32 512, 512
      %83 = vsyncadd [#allocation13], %s82
      %s84 = sshll.u32 [#allocation12], 4
      %s85 = int_to_ptr.vmem [resolvable:$true] %s84
      %90 = dma.hbm_to_vmem [thread:$0]  %s5, 512, %s85, [#allocation13], 128, 128, 8
    $region25: #{tpu_custom_call.1} parent=1 // pred_fallthru
      _
    // Predicated region
    $region26: #{tpu_custom_call.1} parent=1 // pred_check
      _
    $region27: #{tpu_custom_call.1} parent=1 // pred_check_branch
      %92 = sbr.rel (0) target = $region29
    $region28: #{tpu_custom_call.1} parent=1 // pred_region
      _
    $region29: #{tpu_custom_call.1} parent=1 // pred_fallthru
      _
    // Predicated region
    $region30: #{tpu_custom_call.1} parent=1 // pred_check
      _
    $region31: #{tpu_custom_call.1} parent=1 // pred_check_branch
      %94 = sbr.rel (0) target = $region33
    $region32: #{tpu_custom_call.1} parent=1 // pred_region
      _
    $region33: #{tpu_custom_call.1} parent=1 // pred_fallthru
      _
    // Predicated region
    $region34: #{tpu_custom_call.1} parent=1 // pred_check
      _
    $region35: #{tpu_custom_call.1} parent=1 // pred_check_branch
      %96 = sbr.rel (0) target = $region37
    $region36: #{tpu_custom_call.1} parent=1 // pred_region
      _
    $region37: #{tpu_custom_call.1} parent=1 // pred_fallthru
      _
    // Predicated region
    $region38: #{tpu_custom_call.1} parent=1 // pred_check
      _
    $region39: #{tpu_custom_call.1} parent=1 // pred_check_branch
      %98 = sbr.rel (0) target = $region41
    $region40: #{tpu_custom_call.1} parent=1 // pred_region
      %99 = dma.done [#allocation4], 512
    $region41: #{tpu_custom_call.1} parent=1 // pred_fallthru
      _
    // Predicated region
    $region42: #{tpu_custom_call.1} parent=1 // pred_check
      _
    $region43: #{tpu_custom_call.1} parent=1 // pred_check_branch
      %101 = sbr.rel (0) target = $region45
    $region44: #{tpu_custom_call.1} parent=1 // pred_region
      %102 = dma.done [#allocation7], 512
    $region45: #{tpu_custom_call.1} parent=1 // pred_fallthru
      _
    // Predicated region
    $region46: #{tpu_custom_call.1} parent=1 // pred_check
      _
    $region47: #{tpu_custom_call.1} parent=1 // pred_check_branch
      %104 = sbr.rel (0) target = $region49
    $region48: #{tpu_custom_call.1} parent=1 // pred_region
      %105 = dma.done [#allocation7], 512
    $region49: #{tpu_custom_call.1} parent=1 // pred_fallthru
      _
    // Predicated region
    $region50: #{tpu_custom_call.1} parent=1 // pred_check
      _
    $region51: #{tpu_custom_call.1} parent=1 // pred_check_branch
      %107 = sbr.rel (0) target = $region53
    $region52: #{tpu_custom_call.1} parent=1 // pred_region
      %108 = dma.done [#allocation10], 512
    $region53: #{tpu_custom_call.1} parent=1 // pred_fallthru
      _
    // Predicated region
    $region54: #{tpu_custom_call.1} parent=1 // pred_check
      _
    $region55: #{tpu_custom_call.1} parent=1 // pred_check_branch
      %110 = sbr.rel (0) target = $region57
    $region56: #{tpu_custom_call.1} parent=1 // pred_region
      %111 = dma.done [#allocation10], 512
    $region57: #{tpu_custom_call.1} parent=1 // pred_fallthru
      _
    // Predicated region
    $region58: #{tpu_custom_call.1} parent=1 // pred_check
      _
    $region59: #{tpu_custom_call.1} parent=1 // pred_check_branch
      %113 = sbr.rel (0) target = $region61
    $region60: #{tpu_custom_call.1} parent=1 // pred_region
      %114 = dma.done [#allocation13], 512
    $region61: #{tpu_custom_call.1} parent=1 // pred_fallthru
      _
    %p115 = scmp.eq.s32.totalorder 0, 0
    // Predicated region
    $region62: #{tpu_custom_call.1} parent=1 // pred_check
      %p116 = pneg %p115
    $region63: #{tpu_custom_call.1} parent=1 // pred_check_branch
      %118 = sbr.rel (%p116) target = $region65
    $region64: #{tpu_custom_call.1} parent=1 // pred_region
      %vm119 = vcmask 257024
      %120 = vst.msk [vmem:[#allocation2] sm:$0xf] %vm119, 0.0
    $region65: #{tpu_custom_call.1} parent=1 // pred_fallthru
      _
    %v121 = vld [vmem:[#allocation9] sm:$0xff]
    %v122 = vld [vmem:[#allocation9 + $0x8] sm:$0xff]
    %v123 = vld [vmem:[#allocation9 + $0x10] sm:$0xff]
    %v124 = vld [vmem:[#allocation9 + $0x18] sm:$0xff]
    %v125 = vld [vmem:[#allocation11] sm:$0xff]
    %v126 = vld [vmem:[#allocation11 + $0x8] sm:$0xff]
    %v127 = vld [vmem:[#allocation11 + $0x10] sm:$0xff]
    %v128 = vld [vmem:[#allocation11 + $0x18] sm:$0xff]
    %v129 = vld [vmem:[#allocation12] sm:$0xff]
    %v130 = vld [vmem:[#allocation12 + $0x8] sm:$0xff]
    %v131 = vld [vmem:[#allocation12 + $0x10] sm:$0xff]
    %v132 = vld [vmem:[#allocation12 + $0x18] sm:$0xff]
    %v133 = vld [vmem:[%s6] sm:$0x1]
    %v134 = vld [vmem:[%s7] sm:$0x1]
    %v135 = vld [vmem:[%s8] sm:$0x1]
    %v136 = vld [vmem:[#allocation2] sm:$0xf]
    %v138 = vlaneseq
    %v139 = vshrl.u32 %v138, 7
    %v140 = vsub.s32 0, %v139
    %v141 = vrot.slane %v133, %v140
    %vm143 = vcmask 261120
    %v145 = vsel %vm143, %v136, 0
    %147 = vmatprep.subr.mxu0 0.0
    %148 = vmatpush1.msra.mxu0 %v121
    %149 = vmatprep.subr.mxu0 0.0
    %150 = vmatpush1.msra.mxu0 %v122
    %151 = vmatprep.subr.mxu0 0.0
    %152 = vmatpush1.msra.mxu0 %v123
    %153 = vmatprep.subr.mxu0 0.0
    %154 = vmatpush1.msra.mxu0 %v124
    %155 = vmatprep.subr.mxu0 0.0
    %156 = vmatpush1.msra.mxu0 0.0
    %157 = vmatprep.subr.mxu0 0.0
    %158 = vmatpush1.msra.mxu0 0.0
    %159 = vmatprep.subr.mxu0 0.0
    %160 = vmatpush1.msra.mxu0 0.0
    %161 = vmatprep.subr.mxu0 0.0
    %162 = vmatpush1.msra.mxu0 0.0
    %163 = vmatprep.subr.mxu0 0.0
    %164 = vmatpush1.msra.mxu0 0.0
    %165 = vmatprep.subr.mxu0 0.0
    %166 = vmatpush1.msra.mxu0 0.0
    %167 = vmatprep.subr.mxu0 0.0
    %168 = vmatpush1.msra.mxu0 0.0
    %169 = vmatprep.subr.mxu0 0.0
    %170 = vmatpush1.msra.mxu0 0.0
    %171 = vmatprep.subr.mxu0 0.0
    %172 = vmatpush1.msra.mxu0 0.0
    %173 = vmatprep.subr.mxu0 0.0
    %174 = vmatpush1.msra.mxu0 0.0
    %175 = vmatprep.subr.mxu0 0.0
    %176 = vmatpush1.msra.mxu0 0.0
    %177 = vmatprep.subr.mxu0 0.0
    %178 = vmatpush1.msra.mxu0 0.0
    %179 = vmatprep.subr.mxu0 0.0
    %180 = vmatpush1.msra.mxu0 0.0
    %181 = vmatprep.subr.mxu0 0.0
    %182 = vmatpush1.msra.mxu0 0.0
    %183 = vmatprep.subr.mxu0 0.0
    %184 = vmatpush1.msra.mxu0 0.0
    %185 = vmatprep.subr.mxu0 0.0
    %186 = vmatpush1.msra.mxu0 0.0
    %187 = vmatprep.subr.mxu0 0.0
    %188 = vmatpush1.msra.mxu0 0.0
    %189 = vmatprep.subr.mxu0 0.0
    %190 = vmatpush1.msra.mxu0 0.0
    %191 = vmatprep.subr.mxu0 0.0
    %192 = vmatpush1.msra.mxu0 0.0
    %193 = vmatprep.subr.mxu0 0.0
    %194 = vmatpush1.msra.mxu0 0.0
    %195 = vmatprep.subr.mxu0 0.0
    %196 = vmatpush1.msra.mxu0 0.0
    %197 = vmatprep.subr.mxu0 0.0
    %198 = vmatpush1.msra.mxu0 0.0
    %199 = vmatprep.subr.mxu0 0.0
    %200 = vmatpush1.msra.mxu0 0.0
    %201 = vmatprep.subr.mxu0 0.0
    %202 = vmatpush1.msra.mxu0 0.0
    %203 = vmatprep.subr.mxu0 0.0
    %204 = vmatpush1.msra.mxu0 0.0
    %205 = vmatprep.subr.mxu0 0.0
    %206 = vmatpush1.msra.mxu0 0.0
    %207 = vmatprep.subr.mxu0 0.0
    %208 = vmatpush1.msra.mxu0 0.0
    %209 = vmatprep.subr.mxu0 0.0
    %210 = vmatpush1.msra.mxu0 0.0
    %211 = vmatprep.mubr.f32.mxu0 0.0
    %212 = vmatmul.mubr.f32.gmra.mrb[0].mxu0 %v145
    %v213 = vpop.f32.mrb[0].mxu0
    %v214 = vadd.f32 %v141, %v213
    %v215 = vpop.f32.mrb[0].mxu0
    %216 = vdwg.mxu0
    %v218 = vlaneseq
    %v219 = vshrl.u32 %v218, 7
    %v220 = vsub.s32 0, %v219
    %v221 = vrot.slane %v134, %v220
    %223 = vmatprep.subr.mxu0 0.0
    %224 = vmatpush1.msra.mxu0 %v125
    %225 = vmatprep.subr.mxu0 0.0
    %226 = vmatpush1.msra.mxu0 %v126
    %227 = vmatprep.subr.mxu0 0.0
    %228 = vmatpush1.msra.mxu0 %v127
    %229 = vmatprep.subr.mxu0 0.0
    %230 = vmatpush1.msra.mxu0 %v128
    %231 = vmatprep.subr.mxu0 0.0
    %232 = vmatpush1.msra.mxu0 0.0
    %233 = vmatprep.subr.mxu0 0.0
    %234 = vmatpush1.msra.mxu0 0.0
    %235 = vmatprep.subr.mxu0 0.0
    %236 = vmatpush1.msra.mxu0 0.0
    %237 = vmatprep.subr.mxu0 0.0
    %238 = vmatpush1.msra.mxu0 0.0
    %239 = vmatprep.subr.mxu0 0.0
    %240 = vmatpush1.msra.mxu0 0.0
    %241 = vmatprep.subr.mxu0 0.0
    %242 = vmatpush1.msra.mxu0 0.0
    %243 = vmatprep.subr.mxu0 0.0
    %244 = vmatpush1.msra.mxu0 0.0
    %245 = vmatprep.subr.mxu0 0.0
    %246 = vmatpush1.msra.mxu0 0.0
    %247 = vmatprep.subr.mxu0 0.0
    %248 = vmatpush1.msra.mxu0 0.0
    %249 = vmatprep.subr.mxu0 0.0
    %250 = vmatpush1.msra.mxu0 0.0
    %251 = vmatprep.subr.mxu0 0.0
    %252 = vmatpush1.msra.mxu0 0.0
    %253 = vmatprep.subr.mxu0 0.0
    %254 = vmatpush1.msra.mxu0 0.0
    %255 = vmatprep.subr.mxu0 0.0
    %256 = vmatpush1.msra.mxu0 0.0
    %257 = vmatprep.subr.mxu0 0.0
    %258 = vmatpush1.msra.mxu0 0.0
    %259 = vmatprep.subr.mxu0 0.0
    %260 = vmatpush1.msra.mxu0 0.0
    %261 = vmatprep.subr.mxu0 0.0
    %262 = vmatpush1.msra.mxu0 0.0
    %263 = vmatprep.subr.mxu0 0.0
    %264 = vmatpush1.msra.mxu0 0.0
    %265 = vmatprep.subr.mxu0 0.0
    %266 = vmatpush1.msra.mxu0 0.0
    %267 = vmatprep.subr.mxu0 0.0
    %268 = vmatpush1.msra.mxu0 0.0
    %269 = vmatprep.subr.mxu0 0.0
    %270 = vmatpush1.msra.mxu0 0.0
    %271 = vmatprep.subr.mxu0 0.0
    %272 = vmatpush1.msra.mxu0 0.0
    %273 = vmatprep.subr.mxu0 0.0
    %274 = vmatpush1.msra.mxu0 0.0
    %275 = vmatprep.subr.mxu0 0.0
    %276 = vmatpush1.msra.mxu0 0.0
    %277 = vmatprep.subr.mxu0 0.0
    %278 = vmatpush1.msra.mxu0 0.0
    %279 = vmatprep.subr.mxu0 0.0
    %280 = vmatpush1.msra.mxu0 0.0
    %281 = vmatprep.subr.mxu0 0.0
    %282 = vmatpush1.msra.mxu0 0.0
    %283 = vmatprep.subr.mxu0 0.0
    %284 = vmatpush1.msra.mxu0 0.0
    %285 = vmatprep.subr.mxu0 0.0
    %286 = vmatpush1.msra.mxu0 0.0
    %287 = vmatprep.mubr.f32.mxu0 0.0
    %288 = vmatmul.mubr.f32.gmra.mrb[0].mxu0 %v145
    %v289 = vpop.f32.mrb[0].mxu0
    %v290 = vadd.f32 %v221, %v289
    %v291 = vpop.f32.mrb[0].mxu0
    %292 = vdwg.mxu0
    %v294 = vlaneseq
    %v295 = vshrl.u32 %v294, 7
    %v296 = vsub.s32 0, %v295
    %v297 = vrot.slane %v135, %v296
    %299 = vmatprep.subr.mxu0 0.0
    %300 = vmatpush1.msra.mxu0 %v129
    %301 = vmatprep.subr.mxu0 0.0
    %302 = vmatpush1.msra.mxu0 %v130
    %303 = vmatprep.subr.mxu0 0.0
    %304 = vmatpush1.msra.mxu0 %v131
    %305 = vmatprep.subr.mxu0 0.0
    %306 = vmatpush1.msra.mxu0 %v132
    %307 = vmatprep.subr.mxu0 0.0
    %308 = vmatpush1.msra.mxu0 0.0
    %309 = vmatprep.subr.mxu0 0.0
    %310 = vmatpush1.msra.mxu0 0.0
    %311 = vmatprep.subr.mxu0 0.0
    %312 = vmatpush1.msra.mxu0 0.0
    %313 = vmatprep.subr.mxu0 0.0
    %314 = vmatpush1.msra.mxu0 0.0
    %315 = vmatprep.subr.mxu0 0.0
    %316 = vmatpush1.msra.mxu0 0.0
    %317 = vmatprep.subr.mxu0 0.0
    %318 = vmatpush1.msra.mxu0 0.0
    %319 = vmatprep.subr.mxu0 0.0
    %320 = vmatpush1.msra.mxu0 0.0
    %321 = vmatprep.subr.mxu0 0.0
    %322 = vmatpush1.msra.mxu0 0.0
    %323 = vmatprep.subr.mxu0 0.0
    %324 = vmatpush1.msra.mxu0 0.0
    %325 = vmatprep.subr.mxu0 0.0
    %326 = vmatpush1.msra.mxu0 0.0
    %327 = vmatprep.subr.mxu0 0.0
    %328 = vmatpush1.msra.mxu0 0.0
    %329 = vmatprep.subr.mxu0 0.0
    %330 = vmatpush1.msra.mxu0 0.0
    %331 = vmatprep.subr.mxu0 0.0
    %332 = vmatpush1.msra.mxu0 0.0
    %333 = vmatprep.subr.mxu0 0.0
    %334 = vmatpush1.msra.mxu0 0.0
    %335 = vmatprep.subr.mxu0 0.0
    %336 = vmatpush1.msra.mxu0 0.0
    %337 = vmatprep.subr.mxu0 0.0
    %338 = vmatpush1.msra.mxu0 0.0
    %339 = vmatprep.subr.mxu0 0.0
    %340 = vmatpush1.msra.mxu0 0.0
    %341 = vmatprep.subr.mxu0 0.0
    %342 = vmatpush1.msra.mxu0 0.0
    %343 = vmatprep.subr.mxu0 0.0
    %344 = vmatpush1.msra.mxu0 0.0
    %345 = vmatprep.subr.mxu0 0.0
    %346 = vmatpush1.msra.mxu0 0.0
    %347 = vmatprep.subr.mxu0 0.0
    %348 = vmatpush1.msra.mxu0 0.0
    %349 = vmatprep.subr.mxu0 0.0
    %350 = vmatpush1.msra.mxu0 0.0
    %351 = vmatprep.subr.mxu0 0.0
    %352 = vmatpush1.msra.mxu0 0.0
    %353 = vmatprep.subr.mxu0 0.0
    %354 = vmatpush1.msra.mxu0 0.0
    %355 = vmatprep.subr.mxu0 0.0
    %356 = vmatpush1.msra.mxu0 0.0
    %357 = vmatprep.subr.mxu0 0.0
    %358 = vmatpush1.msra.mxu0 0.0
    %359 = vmatprep.subr.mxu0 0.0
    %360 = vmatpush1.msra.mxu0 0.0
    %361 = vmatprep.subr.mxu0 0.0
    %362 = vmatpush1.msra.mxu0 0.0
    %363 = vmatprep.mubr.f32.mxu0 0.0
    %364 = vmatmul.mubr.f32.gmra.mrb[0].mxu0 %v145
    %v365 = vpop.f32.mrb[0].mxu0
    %v366 = vadd.f32 %v297, %v365
    %v367 = vpop.f32.mrb[0].mxu0
    %368 = vdwg.mxu0
    %v369 = vld [vmem:[#allocation3] sm:$0xf]
    %v370 = vadd.f32 %v369, %v214
    %v371 = vxor.u32 %v370, 2147483648
    %v372 = vmul.f32 %v371, 1.442695
    %v373 = vpow.pop %v372
    %v374 = vadd.f32 %v373, 1.0
    %v375 = vrcp.pop %v374
    %v376 = vmul.f32 1.0, %v375
    %v377 = vld [vmem:[#allocation6] sm:$0xf]
    %v378 = vadd.f32 %v377, %v290
    %v379 = vxor.u32 %v378, 2147483648
    %v380 = vmul.f32 %v379, 1.442695
    %v381 = vpow.pop %v380
    %v382 = vadd.f32 %v381, 1.0
    %v383 = vrcp.pop %v382
    %v384 = vmul.f32 1.0, %v383
    %v385 = vld [vmem:[#allocation8] sm:$0xf]
    %v386 = vmul.f32 %v376, %v366
    %v387 = vadd.f32 %v385, %v386
    %v388 = vtanh.pop %v387
    %v389 = vsub.f32 1.0, %v384
    %v390 = vmul.f32 %v389, %v388
    %v391 = vmul.f32 %v384, %v136
    %v392 = vadd.f32 %v390, %v391
    %vm393 = vcmask 257024
    %394 = vst.msk [vmem:[#allocation14] sm:$0xf] %vm393, %v392
    %v396 = vsel %vm143, %v392, 0
    %398 = vmatprep.subr.mxu0 0.0
    %399 = vmatpush1.msra.mxu0 %v121
    %400 = vmatprep.subr.mxu0 0.0
    %401 = vmatpush1.msra.mxu0 %v122
    %402 = vmatprep.subr.mxu0 0.0
    %403 = vmatpush1.msra.mxu0 %v123
    %404 = vmatprep.subr.mxu0 0.0
    %405 = vmatpush1.msra.mxu0 %v124
    %406 = vmatprep.subr.mxu0 0.0
    %407 = vmatpush1.msra.mxu0 0.0
    %408 = vmatprep.subr.mxu0 0.0
    %409 = vmatpush1.msra.mxu0 0.0
    %410 = vmatprep.subr.mxu0 0.0
    %411 = vmatpush1.msra.mxu0 0.0
    %412 = vmatprep.subr.mxu0 0.0
    %413 = vmatpush1.msra.mxu0 0.0
    %414 = vmatprep.subr.mxu0 0.0
    %415 = vmatpush1.msra.mxu0 0.0
    %416 = vmatprep.subr.mxu0 0.0
    %417 = vmatpush1.msra.mxu0 0.0
    %418 = vmatprep.subr.mxu0 0.0
    %419 = vmatpush1.msra.mxu0 0.0
    %420 = vmatprep.subr.mxu0 0.0
    %421 = vmatpush1.msra.mxu0 0.0
    %422 = vmatprep.subr.mxu0 0.0
    %423 = vmatpush1.msra.mxu0 0.0
    %424 = vmatprep.subr.mxu0 0.0
    %425 = vmatpush1.msra.mxu0 0.0
    %426 = vmatprep.subr.mxu0 0.0
    %427 = vmatpush1.msra.mxu0 0.0
    %428 = vmatprep.subr.mxu0 0.0
    %429 = vmatpush1.msra.mxu0 0.0
    %430 = vmatprep.subr.mxu0 0.0
    %431 = vmatpush1.msra.mxu0 0.0
    %432 = vmatprep.subr.mxu0 0.0
    %433 = vmatpush1.msra.mxu0 0.0
    %434 = vmatprep.subr.mxu0 0.0
    %435 = vmatpush1.msra.mxu0 0.0
    %436 = vmatprep.subr.mxu0 0.0
    %437 = vmatpush1.msra.mxu0 0.0
    %438 = vmatprep.subr.mxu0 0.0
    %439 = vmatpush1.msra.mxu0 0.0
    %440 = vmatprep.subr.mxu0 0.0
    %441 = vmatpush1.msra.mxu0 0.0
    %442 = vmatprep.subr.mxu0 0.0
    %443 = vmatpush1.msra.mxu0 0.0
    %444 = vmatprep.subr.mxu0 0.0
    %445 = vmatpush1.msra.mxu0 0.0
    %446 = vmatprep.subr.mxu0 0.0
    %447 = vmatpush1.msra.mxu0 0.0
    %448 = vmatprep.subr.mxu0 0.0
    %449 = vmatpush1.msra.mxu0 0.0
    %450 = vmatprep.subr.mxu0 0.0
    %451 = vmatpush1.msra.mxu0 0.0
    %452 = vmatprep.subr.mxu0 0.0
    %453 = vmatpush1.msra.mxu0 0.0
    %454 = vmatprep.subr.mxu0 0.0
    %455 = vmatpush1.msra.mxu0 0.0
    %456 = vmatprep.subr.mxu0 0.0
    %457 = vmatpush1.msra.mxu0 0.0
    %458 = vmatprep.subr.mxu0 0.0
    %459 = vmatpush1.msra.mxu0 0.0
    %460 = vmatprep.subr.mxu0 0.0
    %461 = vmatpush1.msra.mxu0 0.0
    %462 = vmatprep.mubr.f32.mxu0 0.0
    %463 = vmatmul.mubr.f32.gmra.mrb[0].mxu0 %v396
    %v464 = vpop.f32.mrb[0].mxu0
    %v465 = vadd.f32 %v141, %v464
    %v466 = vpop.f32.mrb[0].mxu0
    %467 = vdwg.mxu0
    %468 = vmatprep.subr.mxu0 0.0
    %469 = vmatpush1.msra.mxu0 %v125
    %470 = vmatprep.subr.mxu0 0.0
    %471 = vmatpush1.msra.mxu0 %v126
    %472 = vmatprep.subr.mxu0 0.0
    %473 = vmatpush1.msra.mxu0 %v127
    %474 = vmatprep.subr.mxu0 0.0
    %475 = vmatpush1.msra.mxu0 %v128
    %476 = vmatprep.subr.mxu0 0.0
    %477 = vmatpush1.msra.mxu0 0.0
    %478 = vmatprep.subr.mxu0 0.0
    %479 = vmatpush1.msra.mxu0 0.0
    %480 = vmatprep.subr.mxu0 0.0
    %481 = vmatpush1.msra.mxu0 0.0
    %482 = vmatprep.subr.mxu0 0.0
    %483 = vmatpush1.msra.mxu0 0.0
    %484 = vmatprep.subr.mxu0 0.0
    %485 = vmatpush1.msra.mxu0 0.0
    %486 = vmatprep.subr.mxu0 0.0
    %487 = vmatpush1.msra.mxu0 0.0
    %488 = vmatprep.subr.mxu0 0.0
    %489 = vmatpush1.msra.mxu0 0.0
    %490 = vmatprep.subr.mxu0 0.0
    %491 = vmatpush1.msra.mxu0 0.0
    %492 = vmatprep.subr.mxu0 0.0
    %493 = vmatpush1.msra.mxu0 0.0
    %494 = vmatprep.subr.mxu0 0.0
    %495 = vmatpush1.msra.mxu0 0.0
    %496 = vmatprep.subr.mxu0 0.0
    %497 = vmatpush1.msra.mxu0 0.0
    %498 = vmatprep.subr.mxu0 0.0
    %499 = vmatpush1.msra.mxu0 0.0
    %500 = vmatprep.subr.mxu0 0.0
    %501 = vmatpush1.msra.mxu0 0.0
    %502 = vmatprep.subr.mxu0 0.0
    %503 = vmatpush1.msra.mxu0 0.0
    %504 = vmatprep.subr.mxu0 0.0
    %505 = vmatpush1.msra.mxu0 0.0
    %506 = vmatprep.subr.mxu0 0.0
    %507 = vmatpush1.msra.mxu0 0.0
    %508 = vmatprep.subr.mxu0 0.0
    %509 = vmatpush1.msra.mxu0 0.0
    %510 = vmatprep.subr.mxu0 0.0
    %511 = vmatpush1.msra.mxu0 0.0
    %512 = vmatprep.subr.mxu0 0.0
    %513 = vmatpush1.msra.mxu0 0.0
    %514 = vmatprep.subr.mxu0 0.0
    %515 = vmatpush1.msra.mxu0 0.0
    %516 = vmatprep.subr.mxu0 0.0
    %517 = vmatpush1.msra.mxu0 0.0
    %518 = vmatprep.subr.mxu0 0.0
    %519 = vmatpush1.msra.mxu0 0.0
    %520 = vmatprep.subr.mxu0 0.0
    %521 = vmatpush1.msra.mxu0 0.0
    %522 = vmatprep.subr.mxu0 0.0
    %523 = vmatpush1.msra.mxu0 0.0
    %524 = vmatprep.subr.mxu0 0.0
    %525 = vmatpush1.msra.mxu0 0.0
    %526 = vmatprep.subr.mxu0 0.0
    %527 = vmatpush1.msra.mxu0 0.0
    %528 = vmatprep.subr.mxu0 0.0
    %529 = vmatpush1.msra.mxu0 0.0
    %530 = vmatprep.subr.mxu0 0.0
    %531 = vmatpush1.msra.mxu0 0.0
    %532 = vmatprep.mubr.f32.mxu0 0.0
    %533 = vmatmul.mubr.f32.gmra.mrb[0].mxu0 %v396
    %v534 = vpop.f32.mrb[0].mxu0
    %v535 = vadd.f32 %v221, %v534
    %v536 = vpop.f32.mrb[0].mxu0
    %537 = vdwg.mxu0
    %538 = vmatprep.subr.mxu0 0.0
    %539 = vmatpush1.msra.mxu0 %v129
    %540 = vmatprep.subr.mxu0 0.0
    %541 = vmatpush1.msra.mxu0 %v130
    %542 = vmatprep.subr.mxu0 0.0
    %543 = vmatpush1.msra.mxu0 %v131
    %544 = vmatprep.subr.mxu0 0.0
    %545 = vmatpush1.msra.mxu0 %v132
    %546 = vmatprep.subr.mxu0 0.0
    %547 = vmatpush1.msra.mxu0 0.0
    %548 = vmatprep.subr.mxu0 0.0
    %549 = vmatpush1.msra.mxu0 0.0
    %550 = vmatprep.subr.mxu0 0.0
    %551 = vmatpush1.msra.mxu0 0.0
    %552 = vmatprep.subr.mxu0 0.0
    %553 = vmatpush1.msra.mxu0 0.0
    %554 = vmatprep.subr.mxu0 0.0
    %555 = vmatpush1.msra.mxu0 0.0
    %556 = vmatprep.subr.mxu0 0.0
    %557 = vmatpush1.msra.mxu0 0.0
    %558 = vmatprep.subr.mxu0 0.0
    %559 = vmatpush1.msra.mxu0 0.0
    %560 = vmatprep.subr.mxu0 0.0
    %561 = vmatpush1.msra.mxu0 0.0
    %562 = vmatprep.subr.mxu0 0.0
    %563 = vmatpush1.msra.mxu0 0.0
    %564 = vmatprep.subr.mxu0 0.0
    %565 = vmatpush1.msra.mxu0 0.0
    %566 = vmatprep.subr.mxu0 0.0
    %567 = vmatpush1.msra.mxu0 0.0
    %568 = vmatprep.subr.mxu0 0.0
    %569 = vmatpush1.msra.mxu0 0.0
    %570 = vmatprep.subr.mxu0 0.0
    %571 = vmatpush1.msra.mxu0 0.0
    %572 = vmatprep.subr.mxu0 0.0
    %573 = vmatpush1.msra.mxu0 0.0
    %574 = vmatprep.subr.mxu0 0.0
    %575 = vmatpush1.msra.mxu0 0.0
    %576 = vmatprep.subr.mxu0 0.0
    %577 = vmatpush1.msra.mxu0 0.0
    %578 = vmatprep.subr.mxu0 0.0
    %579 = vmatpush1.msra.mxu0 0.0
    %580 = vmatprep.subr.mxu0 0.0
    %581 = vmatpush1.msra.mxu0 0.0
    %582 = vmatprep.subr.mxu0 0.0
    %583 = vmatpush1.msra.mxu0 0.0
    %584 = vmatprep.subr.mxu0 0.0
    %585 = vmatpush1.msra.mxu0 0.0
    %586 = vmatprep.subr.mxu0 0.0
    %587 = vmatpush1.msra.mxu0 0.0
    %588 = vmatprep.subr.mxu0 0.0
    %589 = vmatpush1.msra.mxu0 0.0
    %590 = vmatprep.subr.mxu0 0.0
    %591 = vmatpush1.msra.mxu0 0.0
    %592 = vmatprep.subr.mxu0 0.0
    %593 = vmatpush1.msra.mxu0 0.0
    %594 = vmatprep.subr.mxu0 0.0
    %595 = vmatpush1.msra.mxu0 0.0
    %596 = vmatprep.subr.mxu0 0.0
    %597 = vmatpush1.msra.mxu0 0.0
    %598 = vmatprep.subr.mxu0 0.0
    %599 = vmatpush1.msra.mxu0 0.0
    %600 = vmatprep.subr.mxu0 0.0
    %601 = vmatpush1.msra.mxu0 0.0
    %602 = vmatprep.mubr.f32.mxu0 0.0
    %603 = vmatmul.mubr.f32.gmra.mrb[0].mxu0 %v396
    %v604 = vpop.f32.mrb[0].mxu0
    %v605 = vadd.f32 %v297, %v604
    %v606 = vpop.f32.mrb[0].mxu0
    %607 = vdwg.mxu0
    %s608 = scalar_lea.vmem [#allocation3], 4
    %v609 = vld [vmem:[%s608] sm:$0xf]
    %v610 = vadd.f32 %v609, %v465
    %v611 = vxor.u32 %v610, 2147483648
    %v612 = vmul.f32 %v611, 1.442695
    %v613 = vpow.pop %v612
    %v614 = vadd.f32 %v613, 1.0
    %v615 = vrcp.pop %v614
    %v616 = vmul.f32 1.0, %v615
    %s617 = scalar_lea.vmem [#allocation6], 4
    %v618 = vld [vmem:[%s617] sm:$0xf]
    %v619 = vadd.f32 %v618, %v535
    %v620 = vxor.u32 %v619, 2147483648
    %v621 = vmul.f32 %v620, 1.442695
    %v622 = vpow.pop %v621
    %v623 = vadd.f32 %v622, 1.0
    %v624 = vrcp.pop %v623
    %v625 = vmul.f32 1.0, %v624
    %s626 = scalar_lea.vmem [#allocation8], 4
    %v627 = vld [vmem:[%s626] sm:$0xf]
    %v628 = vmul.f32 %v616, %v605
    %v629 = vadd.f32 %v627, %v628
    %v630 = vtanh.pop %v629
    %v631 = vsub.f32 1.0, %v625
    %v632 = vmul.f32 %v631, %v630
    %v633 = vmul.f32 %v625, %v392
    %v634 = vadd.f32 %v632, %v633
    %s635 = scalar_lea.vmem [#allocation14], 4
    %636 = vst.msk [vmem:[%s635] sm:$0xf] %vm393, %v634
    %v638 = vsel %vm143, %v634, 0
    %640 = vmatprep.subr.mxu0 0.0
    %641 = vmatpush1.msra.mxu0 %v121
    %642 = vmatprep.subr.mxu0 0.0
    %643 = vmatpush1.msra.mxu0 %v122
    %644 = vmatprep.subr.mxu0 0.0
    %645 = vmatpush1.msra.mxu0 %v123
    %646 = vmatprep.subr.mxu0 0.0
    %647 = vmatpush1.msra.mxu0 %v124
    %648 = vmatprep.subr.mxu0 0.0
    %649 = vmatpush1.msra.mxu0 0.0
    %650 = vmatprep.subr.mxu0 0.0
    %651 = vmatpush1.msra.mxu0 0.0
    %652 = vmatprep.subr.mxu0 0.0
    %653 = vmatpush1.msra.mxu0 0.0
    %654 = vmatprep.subr.mxu0 0.0
    %655 = vmatpush1.msra.mxu0 0.0
    %656 = vmatprep.subr.mxu0 0.0
    %657 = vmatpush1.msra.mxu0 0.0
    %658 = vmatprep.subr.mxu0 0.0
    %659 = vmatpush1.msra.mxu0 0.0
    %660 = vmatprep.subr.mxu0 0.0
    %661 = vmatpush1.msra.mxu0 0.0
    %662 = vmatprep.subr.mxu0 0.0
    %663 = vmatpush1.msra.mxu0 0.0
    %664 = vmatprep.subr.mxu0 0.0
    %665 = vmatpush1.msra.mxu0 0.0
    %666 = vmatprep.subr.mxu0 0.0
    %667 = vmatpush1.msra.mxu0 0.0
    %668 = vmatprep.subr.mxu0 0.0
    %669 = vmatpush1.msra.mxu0 0.0
    %670 = vmatprep.subr.mxu0 0.0
    %671 = vmatpush1.msra.mxu0 0.0
    %672 = vmatprep.subr.mxu0 0.0
    %673 = vmatpush1.msra.mxu0 0.0
    %674 = vmatprep.subr.mxu0 0.0
    %675 = vmatpush1.msra.mxu0 0.0
    %676 = vmatprep.subr.mxu0 0.0
    %677 = vmatpush1.msra.mxu0 0.0
    %678 = vmatprep.subr.mxu0 0.0
    %679 = vmatpush1.msra.mxu0 0.0
    %680 = vmatprep.subr.mxu0 0.0
    %681 = vmatpush1.msra.mxu0 0.0
    %682 = vmatprep.subr.mxu0 0.0
    %683 = vmatpush1.msra.mxu0 0.0
    %684 = vmatprep.subr.mxu0 0.0
    %685 = vmatpush1.msra.mxu0 0.0
    %686 = vmatprep.subr.mxu0 0.0
    %687 = vmatpush1.msra.mxu0 0.0
    %688 = vmatprep.subr.mxu0 0.0
    %689 = vmatpush1.msra.mxu0 0.0
    %690 = vmatprep.subr.mxu0 0.0
    %691 = vmatpush1.msra.mxu0 0.0
    %692 = vmatprep.subr.mxu0 0.0
    %693 = vmatpush1.msra.mxu0 0.0
    %694 = vmatprep.subr.mxu0 0.0
    %695 = vmatpush1.msra.mxu0 0.0
    %696 = vmatprep.subr.mxu0 0.0
    %697 = vmatpush1.msra.mxu0 0.0
    %698 = vmatprep.subr.mxu0 0.0
    %699 = vmatpush1.msra.mxu0 0.0
    %700 = vmatprep.subr.mxu0 0.0
    %701 = vmatpush1.msra.mxu0 0.0
    %702 = vmatprep.subr.mxu0 0.0
    %703 = vmatpush1.msra.mxu0 0.0
    %704 = vmatprep.mubr.f32.mxu0 0.0
    %705 = vmatmul.mubr.f32.gmra.mrb[0].mxu0 %v638
    %v706 = vpop.f32.mrb[0].mxu0
    %v707 = vadd.f32 %v141, %v706
    %v708 = vpop.f32.mrb[0].mxu0
    %709 = vdwg.mxu0
    %710 = vmatprep.subr.mxu0 0.0
    %711 = vmatpush1.msra.mxu0 %v125
    %712 = vmatprep.subr.mxu0 0.0
    %713 = vmatpush1.msra.mxu0 %v126
    %714 = vmatprep.subr.mxu0 0.0
    %715 = vmatpush1.msra.mxu0 %v127
    %716 = vmatprep.subr.mxu0 0.0
    %717 = vmatpush1.msra.mxu0 %v128
    %718 = vmatprep.subr.mxu0 0.0
    %719 = vmatpush1.msra.mxu0 0.0
    %720 = vmatprep.subr.mxu0 0.0
    %721 = vmatpush1.msra.mxu0 0.0
    %722 = vmatprep.subr.mxu0 0.0
    %723 = vmatpush1.msra.mxu0 0.0
    %724 = vmatprep.subr.mxu0 0.0
    %725 = vmatpush1.msra.mxu0 0.0
    %726 = vmatprep.subr.mxu0 0.0
    %727 = vmatpush1.msra.mxu0 0.0
    %728 = vmatprep.subr.mxu0 0.0
    %729 = vmatpush1.msra.mxu0 0.0
    %730 = vmatprep.subr.mxu0 0.0
    %731 = vmatpush1.msra.mxu0 0.0
    %732 = vmatprep.subr.mxu0 0.0
    %733 = vmatpush1.msra.mxu0 0.0
    %734 = vmatprep.subr.mxu0 0.0
    %735 = vmatpush1.msra.mxu0 0.0
    %736 = vmatprep.subr.mxu0 0.0
    %737 = vmatpush1.msra.mxu0 0.0
    %738 = vmatprep.subr.mxu0 0.0
    %739 = vmatpush1.msra.mxu0 0.0
    %740 = vmatprep.subr.mxu0 0.0
    %741 = vmatpush1.msra.mxu0 0.0
    %742 = vmatprep.subr.mxu0 0.0
    %743 = vmatpush1.msra.mxu0 0.0
    %744 = vmatprep.subr.mxu0 0.0
    %745 = vmatpush1.msra.mxu0 0.0
    %746 = vmatprep.subr.mxu0 0.0
    %747 = vmatpush1.msra.mxu0 0.0
    %748 = vmatprep.subr.mxu0 0.0
    %749 = vmatpush1.msra.mxu0 0.0
    %750 = vmatprep.subr.mxu0 0.0
    %751 = vmatpush1.msra.mxu0 0.0
    %752 = vmatprep.subr.mxu0 0.0
    %753 = vmatpush1.msra.mxu0 0.0
    %754 = vmatprep.subr.mxu0 0.0
    %755 = vmatpush1.msra.mxu0 0.0
    %756 = vmatprep.subr.mxu0 0.0
    %757 = vmatpush1.msra.mxu0 0.0
    %758 = vmatprep.subr.mxu0 0.0
    %759 = vmatpush1.msra.mxu0 0.0
    %760 = vmatprep.subr.mxu0 0.0
    %761 = vmatpush1.msra.mxu0 0.0
    %762 = vmatprep.subr.mxu0 0.0
    %763 = vmatpush1.msra.mxu0 0.0
    %764 = vmatprep.subr.mxu0 0.0
    %765 = vmatpush1.msra.mxu0 0.0
    %766 = vmatprep.subr.mxu0 0.0
    %767 = vmatpush1.msra.mxu0 0.0
    %768 = vmatprep.subr.mxu0 0.0
    %769 = vmatpush1.msra.mxu0 0.0
    %770 = vmatprep.subr.mxu0 0.0
    %771 = vmatpush1.msra.mxu0 0.0
    %772 = vmatprep.subr.mxu0 0.0
    %773 = vmatpush1.msra.mxu0 0.0
    %774 = vmatprep.mubr.f32.mxu0 0.0
    %775 = vmatmul.mubr.f32.gmra.mrb[0].mxu0 %v638
    %v776 = vpop.f32.mrb[0].mxu0
    %v777 = vadd.f32 %v221, %v776
    %v778 = vpop.f32.mrb[0].mxu0
    %779 = vdwg.mxu0
    %780 = vmatprep.subr.mxu0 0.0
    %781 = vmatpush1.msra.mxu0 %v129
    %782 = vmatprep.subr.mxu0 0.0
    %783 = vmatpush1.msra.mxu0 %v130
    %784 = vmatprep.subr.mxu0 0.0
    %785 = vmatpush1.msra.mxu0 %v131
    %786 = vmatprep.subr.mxu0 0.0
    %787 = vmatpush1.msra.mxu0 %v132
    %788 = vmatprep.subr.mxu0 0.0
    %789 = vmatpush1.msra.mxu0 0.0
    %790 = vmatprep.subr.mxu0 0.0
    %791 = vmatpush1.msra.mxu0 0.0
    %792 = vmatprep.subr.mxu0 0.0
    %793 = vmatpush1.msra.mxu0 0.0
    %794 = vmatprep.subr.mxu0 0.0
    %795 = vmatpush1.msra.mxu0 0.0
    %796 = vmatprep.subr.mxu0 0.0
    %797 = vmatpush1.msra.mxu0 0.0
    %798 = vmatprep.subr.mxu0 0.0
    %799 = vmatpush1.msra.mxu0 0.0
    %800 = vmatprep.subr.mxu0 0.0
    %801 = vmatpush1.msra.mxu0 0.0
    %802 = vmatprep.subr.mxu0 0.0
    %803 = vmatpush1.msra.mxu0 0.0
    %804 = vmatprep.subr.mxu0 0.0
    %805 = vmatpush1.msra.mxu0 0.0
    %806 = vmatprep.subr.mxu0 0.0
    %807 = vmatpush1.msra.mxu0 0.0
    %808 = vmatprep.subr.mxu0 0.0
    %809 = vmatpush1.msra.mxu0 0.0
    %810 = vmatprep.subr.mxu0 0.0
    %811 = vmatpush1.msra.mxu0 0.0
    %812 = vmatprep.subr.mxu0 0.0
    %813 = vmatpush1.msra.mxu0 0.0
    %814 = vmatprep.subr.mxu0 0.0
    %815 = vmatpush1.msra.mxu0 0.0
    %816 = vmatprep.subr.mxu0 0.0
    %817 = vmatpush1.msra.mxu0 0.0
    %818 = vmatprep.subr.mxu0 0.0
    %819 = vmatpush1.msra.mxu0 0.0
    %820 = vmatprep.subr.mxu0 0.0
    %821 = vmatpush1.msra.mxu0 0.0
    %822 = vmatprep.subr.mxu0 0.0
    %823 = vmatpush1.msra.mxu0 0.0
    %824 = vmatprep.subr.mxu0 0.0
    %825 = vmatpush1.msra.mxu0 0.0
    %826 = vmatprep.subr.mxu0 0.0
    %827 = vmatpush1.msra.mxu0 0.0
    %828 = vmatprep.subr.mxu0 0.0
    %829 = vmatpush1.msra.mxu0 0.0
    %830 = vmatprep.subr.mxu0 0.0
    %831 = vmatpush1.msra.mxu0 0.0
    %832 = vmatprep.subr.mxu0 0.0
    %833 = vmatpush1.msra.mxu0 0.0
    %834 = vmatprep.subr.mxu0 0.0
    %835 = vmatpush1.msra.mxu0 0.0
    %836 = vmatprep.subr.mxu0 0.0
    %837 = vmatpush1.msra.mxu0 0.0
    %838 = vmatprep.subr.mxu0 0.0
    %839 = vmatpush1.msra.mxu0 0.0
    %840 = vmatprep.subr.mxu0 0.0
    %841 = vmatpush1.msra.mxu0 0.0
    %842 = vmatprep.subr.mxu0 0.0
    %843 = vmatpush1.msra.mxu0 0.0
    %844 = vmatprep.mubr.f32.mxu0 0.0
    %845 = vmatmul.mubr.f32.gmra.mrb[0].mxu0 %v638
    %v846 = vpop.f32.mrb[0].mxu0
    %v847 = vadd.f32 %v297, %v846
    %v848 = vpop.f32.mrb[0].mxu0
    %849 = vdwg.mxu0
    %s850 = scalar_lea.vmem [#allocation3], 8
    %v851 = vld [vmem:[%s850] sm:$0xf]
    %v852 = vadd.f32 %v851, %v707
    %v853 = vxor.u32 %v852, 2147483648
    %v854 = vmul.f32 %v853, 1.442695
    %v855 = vpow.pop %v854
    %v856 = vadd.f32 %v855, 1.0
    %v857 = vrcp.pop %v856
    %v858 = vmul.f32 1.0, %v857
    %s859 = scalar_lea.vmem [#allocation6], 8
    %v860 = vld [vmem:[%s859] sm:$0xf]
    %v861 = vadd.f32 %v860, %v777
    %v862 = vxor.u32 %v861, 2147483648
    %v863 = vmul.f32 %v862, 1.442695
    %v864 = vpow.pop %v863
    %v865 = vadd.f32 %v864, 1.0
    %v866 = vrcp.pop %v865
    %v867 = vmul.f32 1.0, %v866
    %s868 = scalar_lea.vmem [#allocation8], 8
    %v869 = vld [vmem:[%s868] sm:$0xf]
    %v870 = vmul.f32 %v858, %v847
    %v871 = vadd.f32 %v869, %v870
    %v872 = vtanh.pop %v871
    %v873 = vsub.f32 1.0, %v867
    %v874 = vmul.f32 %v873, %v872
    %v875 = vmul.f32 %v867, %v634
    %v876 = vadd.f32 %v874, %v875
    %s877 = scalar_lea.vmem [#allocation14], 8
    %878 = vst.msk [vmem:[%s877] sm:$0xf] %vm393, %v876
    %v880 = vsel %vm143, %v876, 0
    %882 = vmatprep.subr.mxu0 0.0
    %883 = vmatpush1.msra.mxu0 %v121
    %884 = vmatprep.subr.mxu0 0.0
    %885 = vmatpush1.msra.mxu0 %v122
    %886 = vmatprep.subr.mxu0 0.0
    %887 = vmatpush1.msra.mxu0 %v123
    %888 = vmatprep.subr.mxu0 0.0
    %889 = vmatpush1.msra.mxu0 %v124
    %890 = vmatprep.subr.mxu0 0.0
    %891 = vmatpush1.msra.mxu0 0.0
    %892 = vmatprep.subr.mxu0 0.0
    %893 = vmatpush1.msra.mxu0 0.0
    %894 = vmatprep.subr.mxu0 0.0
    %895 = vmatpush1.msra.mxu0 0.0
    %896 = vmatprep.subr.mxu0 0.0
    %897 = vmatpush1.msra.mxu0 0.0
    %898 = vmatprep.subr.mxu0 0.0
    %899 = vmatpush1.msra.mxu0 0.0
    %900 = vmatprep.subr.mxu0 0.0
    %901 = vmatpush1.msra.mxu0 0.0
    %902 = vmatprep.subr.mxu0 0.0
    %903 = vmatpush1.msra.mxu0 0.0
    %904 = vmatprep.subr.mxu0 0.0
    %905 = vmatpush1.msra.mxu0 0.0
    %906 = vmatprep.subr.mxu0 0.0
    %907 = vmatpush1.msra.mxu0 0.0
    %908 = vmatprep.subr.mxu0 0.0
    %909 = vmatpush1.msra.mxu0 0.0
    %910 = vmatprep.subr.mxu0 0.0
    %911 = vmatpush1.msra.mxu0 0.0
    %912 = vmatprep.subr.mxu0 0.0
    %913 = vmatpush1.msra.mxu0 0.0
    %914 = vmatprep.subr.mxu0 0.0
    %915 = vmatpush1.msra.mxu0 0.0
    %916 = vmatprep.subr.mxu0 0.0
    %917 = vmatpush1.msra.mxu0 0.0
    %918 = vmatprep.subr.mxu0 0.0
    %919 = vmatpush1.msra.mxu0 0.0
    %920 = vmatprep.subr.mxu0 0.0
    %921 = vmatpush1.msra.mxu0 0.0
    %922 = vmatprep.subr.mxu0 0.0
    %923 = vmatpush1.msra.mxu0 0.0
    %924 = vmatprep.subr.mxu0 0.0
    %925 = vmatpush1.msra.mxu0 0.0
    %926 = vmatprep.subr.mxu0 0.0
    %927 = vmatpush1.msra.mxu0 0.0
    %928 = vmatprep.subr.mxu0 0.0
    %929 = vmatpush1.msra.mxu0 0.0
    %930 = vmatprep.subr.mxu0 0.0
    %931 = vmatpush1.msra.mxu0 0.0
    %932 = vmatprep.subr.mxu0 0.0
    %933 = vmatpush1.msra.mxu0 0.0
    %934 = vmatprep.subr.mxu0 0.0
    %935 = vmatpush1.msra.mxu0 0.0
    %936 = vmatprep.subr.mxu0 0.0
    %937 = vmatpush1.msra.mxu0 0.0
    %938 = vmatprep.subr.mxu0 0.0
    %939 = vmatpush1.msra.mxu0 0.0
    %940 = vmatprep.subr.mxu0 0.0
    %941 = vmatpush1.msra.mxu0 0.0
    %942 = vmatprep.subr.mxu0 0.0
    %943 = vmatpush1.msra.mxu0 0.0
    %944 = vmatprep.subr.mxu0 0.0
    %945 = vmatpush1.msra.mxu0 0.0
    %946 = vmatprep.mubr.f32.mxu0 0.0
    %947 = vmatmul.mubr.f32.gmra.mrb[0].mxu0 %v880
    %v948 = vpop.f32.mrb[0].mxu0
    %v949 = vadd.f32 %v141, %v948
    %v950 = vpop.f32.mrb[0].mxu0
    %951 = vdwg.mxu0
    %952 = vmatprep.subr.mxu0 0.0
    %953 = vmatpush1.msra.mxu0 %v125
    %954 = vmatprep.subr.mxu0 0.0
    %955 = vmatpush1.msra.mxu0 %v126
    %956 = vmatprep.subr.mxu0 0.0
    %957 = vmatpush1.msra.mxu0 %v127
    %958 = vmatprep.subr.mxu0 0.0
    %959 = vmatpush1.msra.mxu0 %v128
    %960 = vmatprep.subr.mxu0 0.0
    %961 = vmatpush1.msra.mxu0 0.0
    %962 = vmatprep.subr.mxu0 0.0
    %963 = vmatpush1.msra.mxu0 0.0
    %964 = vmatprep.subr.mxu0 0.0
    %965 = vmatpush1.msra.mxu0 0.0
    %966 = vmatprep.subr.mxu0 0.0
    %967 = vmatpush1.msra.mxu0 0.0
    %968 = vmatprep.subr.mxu0 0.0
    %969 = vmatpush1.msra.mxu0 0.0
    %970 = vmatprep.subr.mxu0 0.0
    %971 = vmatpush1.msra.mxu0 0.0
    %972 = vmatprep.subr.mxu0 0.0
    %973 = vmatpush1.msra.mxu0 0.0
    %974 = vmatprep.subr.mxu0 0.0
    %975 = vmatpush1.msra.mxu0 0.0
    %976 = vmatprep.subr.mxu0 0.0
    %977 = vmatpush1.msra.mxu0 0.0
    %978 = vmatprep.subr.mxu0 0.0
    %979 = vmatpush1.msra.mxu0 0.0
    %980 = vmatprep.subr.mxu0 0.0
    %981 = vmatpush1.msra.mxu0 0.0
    %982 = vmatprep.subr.mxu0 0.0
    %983 = vmatpush1.msra.mxu0 0.0
    %984 = vmatprep.subr.mxu0 0.0
    %985 = vmatpush1.msra.mxu0 0.0
    %986 = vmatprep.subr.mxu0 0.0
    %987 = vmatpush1.msra.mxu0 0.0
    %988 = vmatprep.subr.mxu0 0.0
    %989 = vmatpush1.msra.mxu0 0.0
    %990 = vmatprep.subr.mxu0 0.0
    %991 = vmatpush1.msra.mxu0 0.0
    %992 = vmatprep.subr.mxu0 0.0
    %993 = vmatpush1.msra.mxu0 0.0
    %994 = vmatprep.subr.mxu0 0.0
    %995 = vmatpush1.msra.mxu0 0.0
    %996 = vmatprep.subr.mxu0 0.0
    %997 = vmatpush1.msra.mxu0 0.0
    %998 = vmatprep.subr.mxu0 0.0
    %999 = vmatpush1.msra.mxu0 0.0
    %1000 = vmatprep.subr.mxu0 0.0
    %1001 = vmatpush1.msra.mxu0 0.0
    %1002 = vmatprep.subr.mxu0 0.0
    %1003 = vmatpush1.msra.mxu0 0.0
    %1004 = vmatprep.subr.mxu0 0.0
    %1005 = vmatpush1.msra.mxu0 0.0
    %1006 = vmatprep.subr.mxu0 0.0
    %1007 = vmatpush1.msra.mxu0 0.0
    %1008 = vmatprep.subr.mxu0 0.0
    %1009 = vmatpush1.msra.mxu0 0.0
    %1010 = vmatprep.subr.mxu0 0.0
    %1011 = vmatpush1.msra.mxu0 0.0
    %1012 = vmatprep.subr.mxu0 0.0
    %1013 = vmatpush1.msra.mxu0 0.0
    %1014 = vmatprep.subr.mxu0 0.0
    %1015 = vmatpush1.msra.mxu0 0.0
    %1016 = vmatprep.mubr.f32.mxu0 0.0
    %1017 = vmatmul.mubr.f32.gmra.mrb[0].mxu0 %v880
    %v1018 = vpop.f32.mrb[0].mxu0
    %v1019 = vadd.f32 %v221, %v1018
    %v1020 = vpop.f32.mrb[0].mxu0
    %1021 = vdwg.mxu0
    %1022 = vmatprep.subr.mxu0 0.0
    %1023 = vmatpush1.msra.mxu0 %v129
    %1024 = vmatprep.subr.mxu0 0.0
    %1025 = vmatpush1.msra.mxu0 %v130
    %1026 = vmatprep.subr.mxu0 0.0
    %1027 = vmatpush1.msra.mxu0 %v131
    %1028 = vmatprep.subr.mxu0 0.0
    %1029 = vmatpush1.msra.mxu0 %v132
    %1030 = vmatprep.subr.mxu0 0.0
    %1031 = vmatpush1.msra.mxu0 0.0
    %1032 = vmatprep.subr.mxu0 0.0
    %1033 = vmatpush1.msra.mxu0 0.0
    %1034 = vmatprep.subr.mxu0 0.0
    %1035 = vmatpush1.msra.mxu0 0.0
    %1036 = vmatprep.subr.mxu0 0.0
    %1037 = vmatpush1.msra.mxu0 0.0
    %1038 = vmatprep.subr.mxu0 0.0
    %1039 = vmatpush1.msra.mxu0 0.0
    %1040 = vmatprep.subr.mxu0 0.0
    %1041 = vmatpush1.msra.mxu0 0.0
    %1042 = vmatprep.subr.mxu0 0.0
    %1043 = vmatpush1.msra.mxu0 0.0
    %1044 = vmatprep.subr.mxu0 0.0
    %1045 = vmatpush1.msra.mxu0 0.0
    %1046 = vmatprep.subr.mxu0 0.0
    %1047 = vmatpush1.msra.mxu0 0.0
    %1048 = vmatprep.subr.mxu0 0.0
    %1049 = vmatpush1.msra.mxu0 0.0
    %1050 = vmatprep.subr.mxu0 0.0
    %1051 = vmatpush1.msra.mxu0 0.0
    %1052 = vmatprep.subr.mxu0 0.0
    %1053 = vmatpush1.msra.mxu0 0.0
    %1054 = vmatprep.subr.mxu0 0.0
    %1055 = vmatpush1.msra.mxu0 0.0
    %1056 = vmatprep.subr.mxu0 0.0
    %1057 = vmatpush1.msra.mxu0 0.0
    %1058 = vmatprep.subr.mxu0 0.0
    %1059 = vmatpush1.msra.mxu0 0.0
    %1060 = vmatprep.subr.mxu0 0.0
    %1061 = vmatpush1.msra.mxu0 0.0
    %1062 = vmatprep.subr.mxu0 0.0
    %1063 = vmatpush1.msra.mxu0 0.0
    %1064 = vmatprep.subr.mxu0 0.0
    %1065 = vmatpush1.msra.mxu0 0.0
    %1066 = vmatprep.subr.mxu0 0.0
    %1067 = vmatpush1.msra.mxu0 0.0
    %1068 = vmatprep.subr.mxu0 0.0
    %1069 = vmatpush1.msra.mxu0 0.0
    %1070 = vmatprep.subr.mxu0 0.0
    %1071 = vmatpush1.msra.mxu0 0.0
    %1072 = vmatprep.subr.mxu0 0.0
    %1073 = vmatpush1.msra.mxu0 0.0
    %1074 = vmatprep.subr.mxu0 0.0
    %1075 = vmatpush1.msra.mxu0 0.0
    %1076 = vmatprep.subr.mxu0 0.0
    %1077 = vmatpush1.msra.mxu0 0.0
    %1078 = vmatprep.subr.mxu0 0.0
    %1079 = vmatpush1.msra.mxu0 0.0
    %1080 = vmatprep.subr.mxu0 0.0
    %1081 = vmatpush1.msra.mxu0 0.0
    %1082 = vmatprep.subr.mxu0 0.0
    %1083 = vmatpush1.msra.mxu0 0.0
    %1084 = vmatprep.subr.mxu0 0.0
    %1085 = vmatpush1.msra.mxu0 0.0
    %1086 = vmatprep.mubr.f32.mxu0 0.0
    %1087 = vmatmul.mubr.f32.gmra.mrb[0].mxu0 %v880
    %v1088 = vpop.f32.mrb[0].mxu0
    %v1089 = vadd.f32 %v297, %v1088
    %v1090 = vpop.f32.mrb[0].mxu0
    %1091 = vdwg.mxu0
    %s1092 = scalar_lea.vmem [#allocation3], 12
    %v1093 = vld [vmem:[%s1092] sm:$0xf]
    %v1094 = vadd.f32 %v1093, %v949
    %v1095 = vxor.u32 %v1094, 2147483648
    %v1096 = vmul.f32 %v1095, 1.442695
    %v1097 = vpow.pop %v1096
    %v1098 = vadd.f32 %v1097, 1.0
    %v1099 = vrcp.pop %v1098
    %v1100 = vmul.f32 1.0, %v1099
    %s1101 = scalar_lea.vmem [#allocation6], 12
    %v1102 = vld [vmem:[%s1101] sm:$0xf]
    %v1103 = vadd.f32 %v1102, %v1019
    %v1104 = vxor.u32 %v1103, 2147483648
    %v1105 = vmul.f32 %v1104, 1.442695
    %v1106 = vpow.pop %v1105
    %v1107 = vadd.f32 %v1106, 1.0
    %v1108 = vrcp.pop %v1107
    %v1109 = vmul.f32 1.0, %v1108
    %s1110 = scalar_lea.vmem [#allocation8], 12
    %v1111 = vld [vmem:[%s1110] sm:$0xf]
    %v1112 = vmul.f32 %v1100, %v1089
    %v1113 = vadd.f32 %v1111, %v1112
    %v1114 = vtanh.pop %v1113
    %v1115 = vsub.f32 1.0, %v1109
    %v1116 = vmul.f32 %v1115, %v1114
    %v1117 = vmul.f32 %v1109, %v876
    %v1118 = vadd.f32 %v1116, %v1117
    %s1119 = scalar_lea.vmem [#allocation14], 12
    %1120 = vst.msk [vmem:[%s1119] sm:$0xf] %vm393, %v1118
    %v1122 = vsel %vm143, %v1118, 0
    %1124 = vmatprep.subr.mxu0 0.0
    %1125 = vmatpush1.msra.mxu0 %v121
    %1126 = vmatprep.subr.mxu0 0.0
    %1127 = vmatpush1.msra.mxu0 %v122
    %1128 = vmatprep.subr.mxu0 0.0
    %1129 = vmatpush1.msra.mxu0 %v123
    %1130 = vmatprep.subr.mxu0 0.0
    %1131 = vmatpush1.msra.mxu0 %v124
    %1132 = vmatprep.subr.mxu0 0.0
    %1133 = vmatpush1.msra.mxu0 0.0
    %1134 = vmatprep.subr.mxu0 0.0
    %1135 = vmatpush1.msra.mxu0 0.0
    %1136 = vmatprep.subr.mxu0 0.0
    %1137 = vmatpush1.msra.mxu0 0.0
    %1138 = vmatprep.subr.mxu0 0.0
    %1139 = vmatpush1.msra.mxu0 0.0
    %1140 = vmatprep.subr.mxu0 0.0
    %1141 = vmatpush1.msra.mxu0 0.0
    %1142 = vmatprep.subr.mxu0 0.0
    %1143 = vmatpush1.msra.mxu0 0.0
    %1144 = vmatprep.subr.mxu0 0.0
    %1145 = vmatpush1.msra.mxu0 0.0
    %1146 = vmatprep.subr.mxu0 0.0
    %1147 = vmatpush1.msra.mxu0 0.0
    %1148 = vmatprep.subr.mxu0 0.0
    %1149 = vmatpush1.msra.mxu0 0.0
    %1150 = vmatprep.subr.mxu0 0.0
    %1151 = vmatpush1.msra.mxu0 0.0
    %1152 = vmatprep.subr.mxu0 0.0
    %1153 = vmatpush1.msra.mxu0 0.0
    %1154 = vmatprep.subr.mxu0 0.0
    %1155 = vmatpush1.msra.mxu0 0.0
    %1156 = vmatprep.subr.mxu0 0.0
    %1157 = vmatpush1.msra.mxu0 0.0
    %1158 = vmatprep.subr.mxu0 0.0
    %1159 = vmatpush1.msra.mxu0 0.0
    %1160 = vmatprep.subr.mxu0 0.0
    %1161 = vmatpush1.msra.mxu0 0.0
    %1162 = vmatprep.subr.mxu0 0.0
    %1163 = vmatpush1.msra.mxu0 0.0
    %1164 = vmatprep.subr.mxu0 0.0
    %1165 = vmatpush1.msra.mxu0 0.0
    %1166 = vmatprep.subr.mxu0 0.0
    %1167 = vmatpush1.msra.mxu0 0.0
    %1168 = vmatprep.subr.mxu0 0.0
    %1169 = vmatpush1.msra.mxu0 0.0
    %1170 = vmatprep.subr.mxu0 0.0
    %1171 = vmatpush1.msra.mxu0 0.0
    %1172 = vmatprep.subr.mxu0 0.0
    %1173 = vmatpush1.msra.mxu0 0.0
    %1174 = vmatprep.subr.mxu0 0.0
    %1175 = vmatpush1.msra.mxu0 0.0
    %1176 = vmatprep.subr.mxu0 0.0
    %1177 = vmatpush1.msra.mxu0 0.0
    %1178 = vmatprep.subr.mxu0 0.0
    %1179 = vmatpush1.msra.mxu0 0.0
    %1180 = vmatprep.subr.mxu0 0.0
    %1181 = vmatpush1.msra.mxu0 0.0
    %1182 = vmatprep.subr.mxu0 0.0
    %1183 = vmatpush1.msra.mxu0 0.0
    %1184 = vmatprep.subr.mxu0 0.0
    %1185 = vmatpush1.msra.mxu0 0.0
    %1186 = vmatprep.subr.mxu0 0.0
    %1187 = vmatpush1.msra.mxu0 0.0
    %1188 = vmatprep.mubr.f32.mxu0 0.0
    %1189 = vmatmul.mubr.f32.gmra.mrb[0].mxu0 %v1122
    %v1190 = vpop.f32.mrb[0].mxu0
    %v1191 = vadd.f32 %v141, %v1190
    %v1192 = vpop.f32.mrb[0].mxu0
    %1193 = vdwg.mxu0
    %1194 = vmatprep.subr.mxu0 0.0
    %1195 = vmatpush1.msra.mxu0 %v125
    %1196 = vmatprep.subr.mxu0 0.0
    %1197 = vmatpush1.msra.mxu0 %v126
    %1198 = vmatprep.subr.mxu0 0.0
    %1199 = vmatpush1.msra.mxu0 %v127
    %1200 = vmatprep.subr.mxu0 0.0
    %1201 = vmatpush1.msra.mxu0 %v128
    %1202 = vmatprep.subr.mxu0 0.0
    %1203 = vmatpush1.msra.mxu0 0.0
    %1204 = vmatprep.subr.mxu0 0.0
    %1205 = vmatpush1.msra.mxu0 0.0
    %1206 = vmatprep.subr.mxu0 0.0
    %1207 = vmatpush1.msra.mxu0 0.0
    %1208 = vmatprep.subr.mxu0 0.0
    %1209 = vmatpush1.msra.mxu0 0.0
    %1210 = vmatprep.subr.mxu0 0.0
    %1211 = vmatpush1.msra.mxu0 0.0
    %1212 = vmatprep.subr.mxu0 0.0
    %1213 = vmatpush1.msra.mxu0 0.0
    %1214 = vmatprep.subr.mxu0 0.0
    %1215 = vmatpush1.msra.mxu0 0.0
    %1216 = vmatprep.subr.mxu0 0.0
    %1217 = vmatpush1.msra.mxu0 0.0
    %1218 = vmatprep.subr.mxu0 0.0
    %1219 = vmatpush1.msra.mxu0 0.0
    %1220 = vmatprep.subr.mxu0 0.0
    %1221 = vmatpush1.msra.mxu0 0.0
    %1222 = vmatprep.subr.mxu0 0.0
    %1223 = vmatpush1.msra.mxu0 0.0
    %1224 = vmatprep.subr.mxu0 0.0
    %1225 = vmatpush1.msra.mxu0 0.0
    %1226 = vmatprep.subr.mxu0 0.0
    %1227 = vmatpush1.msra.mxu0 0.0
    %1228 = vmatprep.subr.mxu0 0.0
    %1229 = vmatpush1.msra.mxu0 0.0
    %1230 = vmatprep.subr.mxu0 0.0
    %1231 = vmatpush1.msra.mxu0 0.0
    %1232 = vmatprep.subr.mxu0 0.0
    %1233 = vmatpush1.msra.mxu0 0.0
    %1234 = vmatprep.subr.mxu0 0.0
    %1235 = vmatpush1.msra.mxu0 0.0
    %1236 = vmatprep.subr.mxu0 0.0
    %1237 = vmatpush1.msra.mxu0 0.0
    %1238 = vmatprep.subr.mxu0 0.0
    %1239 = vmatpush1.msra.mxu0 0.0
    %1240 = vmatprep.subr.mxu0 0.0
    %1241 = vmatpush1.msra.mxu0 0.0
    %1242 = vmatprep.subr.mxu0 0.0
    %1243 = vmatpush1.msra.mxu0 0.0
    %1244 = vmatprep.subr.mxu0 0.0
    %1245 = vmatpush1.msra.mxu0 0.0
    %1246 = vmatprep.subr.mxu0 0.0
    %1247 = vmatpush1.msra.mxu0 0.0
    %1248 = vmatprep.subr.mxu0 0.0
    %1249 = vmatpush1.msra.mxu0 0.0
    %1250 = vmatprep.subr.mxu0 0.0
    %1251 = vmatpush1.msra.mxu0 0.0
    %1252 = vmatprep.subr.mxu0 0.0
    %1253 = vmatpush1.msra.mxu0 0.0
    %1254 = vmatprep.subr.mxu0 0.0
    %1255 = vmatpush1.msra.mxu0 0.0
    %1256 = vmatprep.subr.mxu0 0.0
    %1257 = vmatpush1.msra.mxu0 0.0
    %1258 = vmatprep.mubr.f32.mxu0 0.0
    %1259 = vmatmul.mubr.f32.gmra.mrb[0].mxu0 %v1122
    %v1260 = vpop.f32.mrb[0].mxu0
    %v1261 = vadd.f32 %v221, %v1260
    %v1262 = vpop.f32.mrb[0].mxu0
    %1263 = vdwg.mxu0
    %1264 = vmatprep.subr.mxu0 0.0
    %1265 = vmatpush1.msra.mxu0 %v129
    %1266 = vmatprep.subr.mxu0 0.0
    %1267 = vmatpush1.msra.mxu0 %v130
    %1268 = vmatprep.subr.mxu0 0.0
    %1269 = vmatpush1.msra.mxu0 %v131
    %1270 = vmatprep.subr.mxu0 0.0
    %1271 = vmatpush1.msra.mxu0 %v132
    %1272 = vmatprep.subr.mxu0 0.0
    %1273 = vmatpush1.msra.mxu0 0.0
    %1274 = vmatprep.subr.mxu0 0.0
    %1275 = vmatpush1.msra.mxu0 0.0
    %1276 = vmatprep.subr.mxu0 0.0
    %1277 = vmatpush1.msra.mxu0 0.0
    %1278 = vmatprep.subr.mxu0 0.0
    %1279 = vmatpush1.msra.mxu0 0.0
    %1280 = vmatprep.subr.mxu0 0.0
    %1281 = vmatpush1.msra.mxu0 0.0
    %1282 = vmatprep.subr.mxu0 0.0
    %1283 = vmatpush1.msra.mxu0 0.0
    %1284 = vmatprep.subr.mxu0 0.0
    %1285 = vmatpush1.msra.mxu0 0.0
    %1286 = vmatprep.subr.mxu0 0.0
    %1287 = vmatpush1.msra.mxu0 0.0
    %1288 = vmatprep.subr.mxu0 0.0
    %1289 = vmatpush1.msra.mxu0 0.0
    %1290 = vmatprep.subr.mxu0 0.0
    %1291 = vmatpush1.msra.mxu0 0.0
    %1292 = vmatprep.subr.mxu0 0.0
    %1293 = vmatpush1.msra.mxu0 0.0
    %1294 = vmatprep.subr.mxu0 0.0
    %1295 = vmatpush1.msra.mxu0 0.0
    %1296 = vmatprep.subr.mxu0 0.0
    %1297 = vmatpush1.msra.mxu0 0.0
    %1298 = vmatprep.subr.mxu0 0.0
    %1299 = vmatpush1.msra.mxu0 0.0
    %1300 = vmatprep.subr.mxu0 0.0
    %1301 = vmatpush1.msra.mxu0 0.0
    %1302 = vmatprep.subr.mxu0 0.0
    %1303 = vmatpush1.msra.mxu0 0.0
    %1304 = vmatprep.subr.mxu0 0.0
    %1305 = vmatpush1.msra.mxu0 0.0
    %1306 = vmatprep.subr.mxu0 0.0
    %1307 = vmatpush1.msra.mxu0 0.0
    %1308 = vmatprep.subr.mxu0 0.0
    %1309 = vmatpush1.msra.mxu0 0.0
    %1310 = vmatprep.subr.mxu0 0.0
    %1311 = vmatpush1.msra.mxu0 0.0
    %1312 = vmatprep.subr.mxu0 0.0
    %1313 = vmatpush1.msra.mxu0 0.0
    %1314 = vmatprep.subr.mxu0 0.0
    %1315 = vmatpush1.msra.mxu0 0.0
    %1316 = vmatprep.subr.mxu0 0.0
    %1317 = vmatpush1.msra.mxu0 0.0
    %1318 = vmatprep.subr.mxu0 0.0
    %1319 = vmatpush1.msra.mxu0 0.0
    %1320 = vmatprep.subr.mxu0 0.0
    %1321 = vmatpush1.msra.mxu0 0.0
    %1322 = vmatprep.subr.mxu0 0.0
    %1323 = vmatpush1.msra.mxu0 0.0
    %1324 = vmatprep.subr.mxu0 0.0
    %1325 = vmatpush1.msra.mxu0 0.0
    %1326 = vmatprep.subr.mxu0 0.0
    %1327 = vmatpush1.msra.mxu0 0.0
    %1328 = vmatprep.mubr.f32.mxu0 0.0
    %1329 = vmatmul.mubr.f32.gmra.mrb[0].mxu0 %v1122
    %v1330 = vpop.f32.mrb[0].mxu0
    %v1331 = vadd.f32 %v297, %v1330
    %v1332 = vpop.f32.mrb[0].mxu0
    %1333 = vdwg.mxu0
    %s1334 = scalar_lea.vmem [#allocation3], 16
    %v1335 = vld [vmem:[%s1334] sm:$0xf]
    %v1336 = vadd.f32 %v1335, %v1191
    %v1337 = vxor.u32 %v1336, 2147483648
    %v1338 = vmul.f32 %v1337, 1.442695
    %v1339 = vpow.pop %v1338
    %v1340 = vadd.f32 %v1339, 1.0
    %v1341 = vrcp.pop %v1340
    %v1342 = vmul.f32 1.0, %v1341
    %s1343 = scalar_lea.vmem [#allocation6], 16
    %v1344 = vld [vmem:[%s1343] sm:$0xf]
    %v1345 = vadd.f32 %v1344, %v1261
    %v1346 = vxor.u32 %v1345, 2147483648
    %v1347 = vmul.f32 %v1346, 1.442695
    %v1348 = vpow.pop %v1347
    %v1349 = vadd.f32 %v1348, 1.0
    %v1350 = vrcp.pop %v1349
    %v1351 = vmul.f32 1.0, %v1350
    %s1352 = scalar_lea.vmem [#allocation8], 16
    %v1353 = vld [vmem:[%s1352] sm:$0xf]
    %v1354 = vmul.f32 %v1342, %v1331
    %v1355 = vadd.f32 %v1353, %v1354
    %v1356 = vtanh.pop %v1355
    %v1357 = vsub.f32 1.0, %v1351
    %v1358 = vmul.f32 %v1357, %v1356
    %v1359 = vmul.f32 %v1351, %v1118
    %v1360 = vadd.f32 %v1358, %v1359
    %s1361 = scalar_lea.vmem [#allocation14], 16
    %1362 = vst.msk [vmem:[%s1361] sm:$0xf] %vm393, %v1360
    %v1364 = vsel %vm143, %v1360, 0
    %1366 = vmatprep.subr.mxu0 0.0
    %1367 = vmatpush1.msra.mxu0 %v121
    %1368 = vmatprep.subr.mxu0 0.0
    %1369 = vmatpush1.msra.mxu0 %v122
    %1370 = vmatprep.subr.mxu0 0.0
    %1371 = vmatpush1.msra.mxu0 %v123
    %1372 = vmatprep.subr.mxu0 0.0
    %1373 = vmatpush1.msra.mxu0 %v124
    %1374 = vmatprep.subr.mxu0 0.0
    %1375 = vmatpush1.msra.mxu0 0.0
    %1376 = vmatprep.subr.mxu0 0.0
    %1377 = vmatpush1.msra.mxu0 0.0
    %1378 = vmatprep.subr.mxu0 0.0
    %1379 = vmatpush1.msra.mxu0 0.0
    %1380 = vmatprep.subr.mxu0 0.0
    %1381 = vmatpush1.msra.mxu0 0.0
    %1382 = vmatprep.subr.mxu0 0.0
    %1383 = vmatpush1.msra.mxu0 0.0
    %1384 = vmatprep.subr.mxu0 0.0
    %1385 = vmatpush1.msra.mxu0 0.0
    %1386 = vmatprep.subr.mxu0 0.0
    %1387 = vmatpush1.msra.mxu0 0.0
    %1388 = vmatprep.subr.mxu0 0.0
    %1389 = vmatpush1.msra.mxu0 0.0
    %1390 = vmatprep.subr.mxu0 0.0
    %1391 = vmatpush1.msra.mxu0 0.0
    %1392 = vmatprep.subr.mxu0 0.0
    %1393 = vmatpush1.msra.mxu0 0.0
    %1394 = vmatprep.subr.mxu0 0.0
    %1395 = vmatpush1.msra.mxu0 0.0
    %1396 = vmatprep.subr.mxu0 0.0
    %1397 = vmatpush1.msra.mxu0 0.0
    %1398 = vmatprep.subr.mxu0 0.0
    %1399 = vmatpush1.msra.mxu0 0.0
    %1400 = vmatprep.subr.mxu0 0.0
    %1401 = vmatpush1.msra.mxu0 0.0
    %1402 = vmatprep.subr.mxu0 0.0
    %1403 = vmatpush1.msra.mxu0 0.0
    %1404 = vmatprep.subr.mxu0 0.0
    %1405 = vmatpush1.msra.mxu0 0.0
    %1406 = vmatprep.subr.mxu0 0.0
    %1407 = vmatpush1.msra.mxu0 0.0
    %1408 = vmatprep.subr.mxu0 0.0
    %1409 = vmatpush1.msra.mxu0 0.0
    %1410 = vmatprep.subr.mxu0 0.0
    %1411 = vmatpush1.msra.mxu0 0.0
    %1412 = vmatprep.subr.mxu0 0.0
    %1413 = vmatpush1.msra.mxu0 0.0
    %1414 = vmatprep.subr.mxu0 0.0
    %1415 = vmatpush1.msra.mxu0 0.0
    %1416 = vmatprep.subr.mxu0 0.0
    %1417 = vmatpush1.msra.mxu0 0.0
    %1418 = vmatprep.subr.mxu0 0.0
    %1419 = vmatpush1.msra.mxu0 0.0
    %1420 = vmatprep.subr.mxu0 0.0
    %1421 = vmatpush1.msra.mxu0 0.0
    %1422 = vmatprep.subr.mxu0 0.0
    %1423 = vmatpush1.msra.mxu0 0.0
    %1424 = vmatprep.subr.mxu0 0.0
    %1425 = vmatpush1.msra.mxu0 0.0
    %1426 = vmatprep.subr.mxu0 0.0
    %1427 = vmatpush1.msra.mxu0 0.0
    %1428 = vmatprep.subr.mxu0 0.0
    %1429 = vmatpush1.msra.mxu0 0.0
    %1430 = vmatprep.mubr.f32.mxu0 0.0
    %1431 = vmatmul.mubr.f32.gmra.mrb[0].mxu0 %v1364
    %v1432 = vpop.f32.mrb[0].mxu0
    %v1433 = vadd.f32 %v141, %v1432
    %v1434 = vpop.f32.mrb[0].mxu0
    %1435 = vdwg.mxu0
    %1436 = vmatprep.subr.mxu0 0.0
    %1437 = vmatpush1.msra.mxu0 %v125
    %1438 = vmatprep.subr.mxu0 0.0
    %1439 = vmatpush1.msra.mxu0 %v126
    %1440 = vmatprep.subr.mxu0 0.0
    %1441 = vmatpush1.msra.mxu0 %v127
    %1442 = vmatprep.subr.mxu0 0.0
    %1443 = vmatpush1.msra.mxu0 %v128
    %1444 = vmatprep.subr.mxu0 0.0
    %1445 = vmatpush1.msra.mxu0 0.0
    %1446 = vmatprep.subr.mxu0 0.0
    %1447 = vmatpush1.msra.mxu0 0.0
    %1448 = vmatprep.subr.mxu0 0.0
    %1449 = vmatpush1.msra.mxu0 0.0
    %1450 = vmatprep.subr.mxu0 0.0
    %1451 = vmatpush1.msra.mxu0 0.0
    %1452 = vmatprep.subr.mxu0 0.0
    %1453 = vmatpush1.msra.mxu0 0.0
    %1454 = vmatprep.subr.mxu0 0.0
    %1455 = vmatpush1.msra.mxu0 0.0
    %1456 = vmatprep.subr.mxu0 0.0
    %1457 = vmatpush1.msra.mxu0 0.0
    %1458 = vmatprep.subr.mxu0 0.0
    %1459 = vmatpush1.msra.mxu0 0.0
    %1460 = vmatprep.subr.mxu0 0.0
    %1461 = vmatpush1.msra.mxu0 0.0
    %1462 = vmatprep.subr.mxu0 0.0
    %1463 = vmatpush1.msra.mxu0 0.0
    %1464 = vmatprep.subr.mxu0 0.0
    %1465 = vmatpush1.msra.mxu0 0.0
    %1466 = vmatprep.subr.mxu0 0.0
    %1467 = vmatpush1.msra.mxu0 0.0
    %1468 = vmatprep.subr.mxu0 0.0
    %1469 = vmatpush1.msra.mxu0 0.0
    %1470 = vmatprep.subr.mxu0 0.0
    %1471 = vmatpush1.msra.mxu0 0.0
    %1472 = vmatprep.subr.mxu0 0.0
    %1473 = vmatpush1.msra.mxu0 0.0
    %1474 = vmatprep.subr.mxu0 0.0
    %1475 = vmatpush1.msra.mxu0 0.0
    %1476 = vmatprep.subr.mxu0 0.0
    %1477 = vmatpush1.msra.mxu0 0.0
    %1478 = vmatprep.subr.mxu0 0.0
    %1479 = vmatpush1.msra.mxu0 0.0
    %1480 = vmatprep.subr.mxu0 0.0
    %1481 = vmatpush1.msra.mxu0 0.0
    %1482 = vmatprep.subr.mxu0 0.0
    %1483 = vmatpush1.msra.mxu0 0.0
    %1484 = vmatprep.subr.mxu0 0.0
    %1485 = vmatpush1.msra.mxu0 0.0
    %1486 = vmatprep.subr.mxu0 0.0
    %1487 = vmatpush1.msra.mxu0 0.0
    %1488 = vmatprep.subr.mxu0 0.0
    %1489 = vmatpush1.msra.mxu0 0.0
    %1490 = vmatprep.subr.mxu0 0.0
    %1491 = vmatpush1.msra.mxu0 0.0
    %1492 = vmatprep.subr.mxu0 0.0
    %1493 = vmatpush1.msra.mxu0 0.0
    %1494 = vmatprep.subr.mxu0 0.0
    %1495 = vmatpush1.msra.mxu0 0.0
    %1496 = vmatprep.subr.mxu0 0.0
    %1497 = vmatpush1.msra.mxu0 0.0
    %1498 = vmatprep.subr.mxu0 0.0
    %1499 = vmatpush1.msra.mxu0 0.0
    %1500 = vmatprep.mubr.f32.mxu0 0.0
    %1501 = vmatmul.mubr.f32.gmra.mrb[0].mxu0 %v1364
    %v1502 = vpop.f32.mrb[0].mxu0
    %v1503 = vadd.f32 %v221, %v1502
    %v1504 = vpop.f32.mrb[0].mxu0
    %1505 = vdwg.mxu0
    %1506 = vmatprep.subr.mxu0 0.0
    %1507 = vmatpush1.msra.mxu0 %v129
    %1508 = vmatprep.subr.mxu0 0.0
    %1509 = vmatpush1.msra.mxu0 %v130
    %1510 = vmatprep.subr.mxu0 0.0
    %1511 = vmatpush1.msra.mxu0 %v131
    %1512 = vmatprep.subr.mxu0 0.0
    %1513 = vmatpush1.msra.mxu0 %v132
    %1514 = vmatprep.subr.mxu0 0.0
    %1515 = vmatpush1.msra.mxu0 0.0
    %1516 = vmatprep.subr.mxu0 0.0
    %1517 = vmatpush1.msra.mxu0 0.0
    %1518 = vmatprep.subr.mxu0 0.0
    %1519 = vmatpush1.msra.mxu0 0.0
    %1520 = vmatprep.subr.mxu0 0.0
    %1521 = vmatpush1.msra.mxu0 0.0
    %1522 = vmatprep.subr.mxu0 0.0
    %1523 = vmatpush1.msra.mxu0 0.0
    %1524 = vmatprep.subr.mxu0 0.0
    %1525 = vmatpush1.msra.mxu0 0.0
    %1526 = vmatprep.subr.mxu0 0.0
    %1527 = vmatpush1.msra.mxu0 0.0
    %1528 = vmatprep.subr.mxu0 0.0
    %1529 = vmatpush1.msra.mxu0 0.0
    %1530 = vmatprep.subr.mxu0 0.0
    %1531 = vmatpush1.msra.mxu0 0.0
    %1532 = vmatprep.subr.mxu0 0.0
    %1533 = vmatpush1.msra.mxu0 0.0
    %1534 = vmatprep.subr.mxu0 0.0
    %1535 = vmatpush1.msra.mxu0 0.0
    %1536 = vmatprep.subr.mxu0 0.0
    %1537 = vmatpush1.msra.mxu0 0.0
    %1538 = vmatprep.subr.mxu0 0.0
    %1539 = vmatpush1.msra.mxu0 0.0
    %1540 = vmatprep.subr.mxu0 0.0
    %1541 = vmatpush1.msra.mxu0 0.0
    %1542 = vmatprep.subr.mxu0 0.0
    %1543 = vmatpush1.msra.mxu0 0.0
    %1544 = vmatprep.subr.mxu0 0.0
    %1545 = vmatpush1.msra.mxu0 0.0
    %1546 = vmatprep.subr.mxu0 0.0
    %1547 = vmatpush1.msra.mxu0 0.0
    %1548 = vmatprep.subr.mxu0 0.0
    %1549 = vmatpush1.msra.mxu0 0.0
    %1550 = vmatprep.subr.mxu0 0.0
    %1551 = vmatpush1.msra.mxu0 0.0
    %1552 = vmatprep.subr.mxu0 0.0
    %1553 = vmatpush1.msra.mxu0 0.0
    %1554 = vmatprep.subr.mxu0 0.0
    %1555 = vmatpush1.msra.mxu0 0.0
    %1556 = vmatprep.subr.mxu0 0.0
    %1557 = vmatpush1.msra.mxu0 0.0
    %1558 = vmatprep.subr.mxu0 0.0
    %1559 = vmatpush1.msra.mxu0 0.0
    %1560 = vmatprep.subr.mxu0 0.0
    %1561 = vmatpush1.msra.mxu0 0.0
    %1562 = vmatprep.subr.mxu0 0.0
    %1563 = vmatpush1.msra.mxu0 0.0
    %1564 = vmatprep.subr.mxu0 0.0
    %1565 = vmatpush1.msra.mxu0 0.0
    %1566 = vmatprep.subr.mxu0 0.0
    %1567 = vmatpush1.msra.mxu0 0.0
    %1568 = vmatprep.subr.mxu0 0.0
    %1569 = vmatpush1.msra.mxu0 0.0
    %1570 = vmatprep.mubr.f32.mxu0 0.0
    %1571 = vmatmul.mubr.f32.gmra.mrb[0].mxu0 %v1364
    %v1572 = vpop.f32.mrb[0].mxu0
    %v1573 = vadd.f32 %v297, %v1572
    %v1574 = vpop.f32.mrb[0].mxu0
    %1575 = vdwg.mxu0
    %s1576 = scalar_lea.vmem [#allocation3], 20
    %v1577 = vld [vmem:[%s1576] sm:$0xf]
    %v1578 = vadd.f32 %v1577, %v1433
    %v1579 = vxor.u32 %v1578, 2147483648
    %v1580 = vmul.f32 %v1579, 1.442695
    %v1581 = vpow.pop %v1580
    %v1582 = vadd.f32 %v1581, 1.0
    %v1583 = vrcp.pop %v1582
    %v1584 = vmul.f32 1.0, %v1583
    %s1585 = scalar_lea.vmem [#allocation6], 20
    %v1586 = vld [vmem:[%s1585] sm:$0xf]
    %v1587 = vadd.f32 %v1586, %v1503
    %v1588 = vxor.u32 %v1587, 2147483648
    %v1589 = vmul.f32 %v1588, 1.442695
    %v1590 = vpow.pop %v1589
    %v1591 = vadd.f32 %v1590, 1.0
    %v1592 = vrcp.pop %v1591
    %v1593 = vmul.f32 1.0, %v1592
    %s1594 = scalar_lea.vmem [#allocation8], 20
    %v1595 = vld [vmem:[%s1594] sm:$0xf]
    %v1596 = vmul.f32 %v1584, %v1573
    %v1597 = vadd.f32 %v1595, %v1596
    %v1598 = vtanh.pop %v1597
    %v1599 = vsub.f32 1.0, %v1593
    %v1600 = vmul.f32 %v1599, %v1598
    %v1601 = vmul.f32 %v1593, %v1360
    %v1602 = vadd.f32 %v1600, %v1601
    %s1603 = scalar_lea.vmem [#allocation14], 20
    %1604 = vst.msk [vmem:[%s1603] sm:$0xf] %vm393, %v1602
    %v1606 = vsel %vm143, %v1602, 0
    %1608 = vmatprep.subr.mxu0 0.0
    %1609 = vmatpush1.msra.mxu0 %v121
    %1610 = vmatprep.subr.mxu0 0.0
    %1611 = vmatpush1.msra.mxu0 %v122
    %1612 = vmatprep.subr.mxu0 0.0
    %1613 = vmatpush1.msra.mxu0 %v123
    %1614 = vmatprep.subr.mxu0 0.0
    %1615 = vmatpush1.msra.mxu0 %v124
    %1616 = vmatprep.subr.mxu0 0.0
    %1617 = vmatpush1.msra.mxu0 0.0
    %1618 = vmatprep.subr.mxu0 0.0
    %1619 = vmatpush1.msra.mxu0 0.0
    %1620 = vmatprep.subr.mxu0 0.0
    %1621 = vmatpush1.msra.mxu0 0.0
    %1622 = vmatprep.subr.mxu0 0.0
    %1623 = vmatpush1.msra.mxu0 0.0
    %1624 = vmatprep.subr.mxu0 0.0
    %1625 = vmatpush1.msra.mxu0 0.0
    %1626 = vmatprep.subr.mxu0 0.0
    %1627 = vmatpush1.msra.mxu0 0.0
    %1628 = vmatprep.subr.mxu0 0.0
    %1629 = vmatpush1.msra.mxu0 0.0
    %1630 = vmatprep.subr.mxu0 0.0
    %1631 = vmatpush1.msra.mxu0 0.0
    %1632 = vmatprep.subr.mxu0 0.0
    %1633 = vmatpush1.msra.mxu0 0.0
    %1634 = vmatprep.subr.mxu0 0.0
    %1635 = vmatpush1.msra.mxu0 0.0
    %1636 = vmatprep.subr.mxu0 0.0
    %1637 = vmatpush1.msra.mxu0 0.0
    %1638 = vmatprep.subr.mxu0 0.0
    %1639 = vmatpush1.msra.mxu0 0.0
    %1640 = vmatprep.subr.mxu0 0.0
    %1641 = vmatpush1.msra.mxu0 0.0
    %1642 = vmatprep.subr.mxu0 0.0
    %1643 = vmatpush1.msra.mxu0 0.0
    %1644 = vmatprep.subr.mxu0 0.0
    %1645 = vmatpush1.msra.mxu0 0.0
    %1646 = vmatprep.subr.mxu0 0.0
    %1647 = vmatpush1.msra.mxu0 0.0
    %1648 = vmatprep.subr.mxu0 0.0
    %1649 = vmatpush1.msra.mxu0 0.0
    %1650 = vmatprep.subr.mxu0 0.0
    %1651 = vmatpush1.msra.mxu0 0.0
    %1652 = vmatprep.subr.mxu0 0.0
    %1653 = vmatpush1.msra.mxu0 0.0
    %1654 = vmatprep.subr.mxu0 0.0
    %1655 = vmatpush1.msra.mxu0 0.0
    %1656 = vmatprep.subr.mxu0 0.0
    %1657 = vmatpush1.msra.mxu0 0.0
    %1658 = vmatprep.subr.mxu0 0.0
    %1659 = vmatpush1.msra.mxu0 0.0
    %1660 = vmatprep.subr.mxu0 0.0
    %1661 = vmatpush1.msra.mxu0 0.0
    %1662 = vmatprep.subr.mxu0 0.0
    %1663 = vmatpush1.msra.mxu0 0.0
    %1664 = vmatprep.subr.mxu0 0.0
    %1665 = vmatpush1.msra.mxu0 0.0
    %1666 = vmatprep.subr.mxu0 0.0
    %1667 = vmatpush1.msra.mxu0 0.0
    %1668 = vmatprep.subr.mxu0 0.0
    %1669 = vmatpush1.msra.mxu0 0.0
    %1670 = vmatprep.subr.mxu0 0.0
    %1671 = vmatpush1.msra.mxu0 0.0
    %1672 = vmatprep.mubr.f32.mxu0 0.0
    %1673 = vmatmul.mubr.f32.gmra.mrb[0].mxu0 %v1606
    %v1674 = vpop.f32.mrb[0].mxu0
    %v1675 = vadd.f32 %v141, %v1674
    %v1676 = vpop.f32.mrb[0].mxu0
    %1677 = vdwg.mxu0
    %1678 = vmatprep.subr.mxu0 0.0
    %1679 = vmatpush1.msra.mxu0 %v125
    %1680 = vmatprep.subr.mxu0 0.0
    %1681 = vmatpush1.msra.mxu0 %v126
    %1682 = vmatprep.subr.mxu0 0.0
    %1683 = vmatpush1.msra.mxu0 %v127
    %1684 = vmatprep.subr.mxu0 0.0
    %1685 = vmatpush1.msra.mxu0 %v128
    %1686 = vmatprep.subr.mxu0 0.0
    %1687 = vmatpush1.msra.mxu0 0.0
    %1688 = vmatprep.subr.mxu0 0.0
    %1689 = vmatpush1.msra.mxu0 0.0
    %1690 = vmatprep.subr.mxu0 0.0
    %1691 = vmatpush1.msra.mxu0 0.0
    %1692 = vmatprep.subr.mxu0 0.0
    %1693 = vmatpush1.msra.mxu0 0.0
    %1694 = vmatprep.subr.mxu0 0.0
    %1695 = vmatpush1.msra.mxu0 0.0
    %1696 = vmatprep.subr.mxu0 0.0
    %1697 = vmatpush1.msra.mxu0 0.0
    %1698 = vmatprep.subr.mxu0 0.0
    %1699 = vmatpush1.msra.mxu0 0.0
    %1700 = vmatprep.subr.mxu0 0.0
    %1701 = vmatpush1.msra.mxu0 0.0
    %1702 = vmatprep.subr.mxu0 0.0
    %1703 = vmatpush1.msra.mxu0 0.0
    %1704 = vmatprep.subr.mxu0 0.0
    %1705 = vmatpush1.msra.mxu0 0.0
    %1706 = vmatprep.subr.mxu0 0.0
    %1707 = vmatpush1.msra.mxu0 0.0
    %1708 = vmatprep.subr.mxu0 0.0
    %1709 = vmatpush1.msra.mxu0 0.0
    %1710 = vmatprep.subr.mxu0 0.0
    %1711 = vmatpush1.msra.mxu0 0.0
    %1712 = vmatprep.subr.mxu0 0.0
    %1713 = vmatpush1.msra.mxu0 0.0
    %1714 = vmatprep.subr.mxu0 0.0
    %1715 = vmatpush1.msra.mxu0 0.0
    %1716 = vmatprep.subr.mxu0 0.0
    %1717 = vmatpush1.msra.mxu0 0.0
    %1718 = vmatprep.subr.mxu0 0.0
    %1719 = vmatpush1.msra.mxu0 0.0
    %1720 = vmatprep.subr.mxu0 0.0
    %1721 = vmatpush1.msra.mxu0 0.0
    %1722 = vmatprep.subr.mxu0 0.0
    %1723 = vmatpush1.msra.mxu0 0.0
    %1724 = vmatprep.subr.mxu0 0.0
    %1725 = vmatpush1.msra.mxu0 0.0
    %1726 = vmatprep.subr.mxu0 0.0
    %1727 = vmatpush1.msra.mxu0 0.0
    %1728 = vmatprep.subr.mxu0 0.0
    %1729 = vmatpush1.msra.mxu0 0.0
    %1730 = vmatprep.subr.mxu0 0.0
    %1731 = vmatpush1.msra.mxu0 0.0
    %1732 = vmatprep.subr.mxu0 0.0
    %1733 = vmatpush1.msra.mxu0 0.0
    %1734 = vmatprep.subr.mxu0 0.0
    %1735 = vmatpush1.msra.mxu0 0.0
    %1736 = vmatprep.subr.mxu0 0.0
    %1737 = vmatpush1.msra.mxu0 0.0
    %1738 = vmatprep.subr.mxu0 0.0
    %1739 = vmatpush1.msra.mxu0 0.0
    %1740 = vmatprep.subr.mxu0 0.0
    %1741 = vmatpush1.msra.mxu0 0.0
    %1742 = vmatprep.mubr.f32.mxu0 0.0
    %1743 = vmatmul.mubr.f32.gmra.mrb[0].mxu0 %v1606
    %v1744 = vpop.f32.mrb[0].mxu0
    %v1745 = vadd.f32 %v221, %v1744
    %v1746 = vpop.f32.mrb[0].mxu0
    %1747 = vdwg.mxu0
    %1748 = vmatprep.subr.mxu0 0.0
    %1749 = vmatpush1.msra.mxu0 %v129
    %1750 = vmatprep.subr.mxu0 0.0
    %1751 = vmatpush1.msra.mxu0 %v130
    %1752 = vmatprep.subr.mxu0 0.0
    %1753 = vmatpush1.msra.mxu0 %v131
    %1754 = vmatprep.subr.mxu0 0.0
    %1755 = vmatpush1.msra.mxu0 %v132
    %1756 = vmatprep.subr.mxu0 0.0
    %1757 = vmatpush1.msra.mxu0 0.0
    %1758 = vmatprep.subr.mxu0 0.0
    %1759 = vmatpush1.msra.mxu0 0.0
    %1760 = vmatprep.subr.mxu0 0.0
    %1761 = vmatpush1.msra.mxu0 0.0
    %1762 = vmatprep.subr.mxu0 0.0
    %1763 = vmatpush1.msra.mxu0 0.0
    %1764 = vmatprep.subr.mxu0 0.0
    %1765 = vmatpush1.msra.mxu0 0.0
    %1766 = vmatprep.subr.mxu0 0.0
    %1767 = vmatpush1.msra.mxu0 0.0
    %1768 = vmatprep.subr.mxu0 0.0
    %1769 = vmatpush1.msra.mxu0 0.0
    %1770 = vmatprep.subr.mxu0 0.0
    %1771 = vmatpush1.msra.mxu0 0.0
    %1772 = vmatprep.subr.mxu0 0.0
    %1773 = vmatpush1.msra.mxu0 0.0
    %1774 = vmatprep.subr.mxu0 0.0
    %1775 = vmatpush1.msra.mxu0 0.0
    %1776 = vmatprep.subr.mxu0 0.0
    %1777 = vmatpush1.msra.mxu0 0.0
    %1778 = vmatprep.subr.mxu0 0.0
    %1779 = vmatpush1.msra.mxu0 0.0
    %1780 = vmatprep.subr.mxu0 0.0
    %1781 = vmatpush1.msra.mxu0 0.0
    %1782 = vmatprep.subr.mxu0 0.0
    %1783 = vmatpush1.msra.mxu0 0.0
    %1784 = vmatprep.subr.mxu0 0.0
    %1785 = vmatpush1.msra.mxu0 0.0
    %1786 = vmatprep.subr.mxu0 0.0
    %1787 = vmatpush1.msra.mxu0 0.0
    %1788 = vmatprep.subr.mxu0 0.0
    %1789 = vmatpush1.msra.mxu0 0.0
    %1790 = vmatprep.subr.mxu0 0.0
    %1791 = vmatpush1.msra.mxu0 0.0
    %1792 = vmatprep.subr.mxu0 0.0
    %1793 = vmatpush1.msra.mxu0 0.0
    %1794 = vmatprep.subr.mxu0 0.0
    %1795 = vmatpush1.msra.mxu0 0.0
    %1796 = vmatprep.subr.mxu0 0.0
    %1797 = vmatpush1.msra.mxu0 0.0
    %1798 = vmatprep.subr.mxu0 0.0
    %1799 = vmatpush1.msra.mxu0 0.0
    %1800 = vmatprep.subr.mxu0 0.0
    %1801 = vmatpush1.msra.mxu0 0.0
    %1802 = vmatprep.subr.mxu0 0.0
    %1803 = vmatpush1.msra.mxu0 0.0
    %1804 = vmatprep.subr.mxu0 0.0
    %1805 = vmatpush1.msra.mxu0 0.0
    %1806 = vmatprep.subr.mxu0 0.0
    %1807 = vmatpush1.msra.mxu0 0.0
    %1808 = vmatprep.subr.mxu0 0.0
    %1809 = vmatpush1.msra.mxu0 0.0
    %1810 = vmatprep.subr.mxu0 0.0
    %1811 = vmatpush1.msra.mxu0 0.0
    %1812 = vmatprep.mubr.f32.mxu0 0.0
    %1813 = vmatmul.mubr.f32.gmra.mrb[0].mxu0 %v1606
    %v1814 = vpop.f32.mrb[0].mxu0
    %v1815 = vadd.f32 %v297, %v1814
    %v1816 = vpop.f32.mrb[0].mxu0
    %1817 = vdwg.mxu0
    %s1818 = scalar_lea.vmem [#allocation3], 24
    %v1819 = vld [vmem:[%s1818] sm:$0xf]
    %v1820 = vadd.f32 %v1819, %v1675
    %v1821 = vxor.u32 %v1820, 2147483648
    %v1822 = vmul.f32 %v1821, 1.442695
    %v1823 = vpow.pop %v1822
    %v1824 = vadd.f32 %v1823, 1.0
    %v1825 = vrcp.pop %v1824
    %v1826 = vmul.f32 1.0, %v1825
    %s1827 = scalar_lea.vmem [#allocation6], 24
    %v1828 = vld [vmem:[%s1827] sm:$0xf]
    %v1829 = vadd.f32 %v1828, %v1745
    %v1830 = vxor.u32 %v1829, 2147483648
    %v1831 = vmul.f32 %v1830, 1.442695
    %v1832 = vpow.pop %v1831
    %v1833 = vadd.f32 %v1832, 1.0
    %v1834 = vrcp.pop %v1833
    %v1835 = vmul.f32 1.0, %v1834
    %s1836 = scalar_lea.vmem [#allocation8], 24
    %v1837 = vld [vmem:[%s1836] sm:$0xf]
    %v1838 = vmul.f32 %v1826, %v1815
    %v1839 = vadd.f32 %v1837, %v1838
    %v1840 = vtanh.pop %v1839
    %v1841 = vsub.f32 1.0, %v1835
    %v1842 = vmul.f32 %v1841, %v1840
    %v1843 = vmul.f32 %v1835, %v1602
    %v1844 = vadd.f32 %v1842, %v1843
    %s1845 = scalar_lea.vmem [#allocation14], 24
    %1846 = vst.msk [vmem:[%s1845] sm:$0xf] %vm393, %v1844
    %v1848 = vsel %vm143, %v1844, 0
    %1850 = vmatprep.subr.mxu0 0.0
    %1851 = vmatpush1.msra.mxu0 %v121
    %1852 = vmatprep.subr.mxu0 0.0
    %1853 = vmatpush1.msra.mxu0 %v122
    %1854 = vmatprep.subr.mxu0 0.0
    %1855 = vmatpush1.msra.mxu0 %v123
    %1856 = vmatprep.subr.mxu0 0.0
    %1857 = vmatpush1.msra.mxu0 %v124
    %1858 = vmatprep.subr.mxu0 0.0
    %1859 = vmatpush1.msra.mxu0 0.0
    %1860 = vmatprep.subr.mxu0 0.0
    %1861 = vmatpush1.msra.mxu0 0.0
    %1862 = vmatprep.subr.mxu0 0.0
    %1863 = vmatpush1.msra.mxu0 0.0
    %1864 = vmatprep.subr.mxu0 0.0
    %1865 = vmatpush1.msra.mxu0 0.0
    %1866 = vmatprep.subr.mxu0 0.0
    %1867 = vmatpush1.msra.mxu0 0.0
    %1868 = vmatprep.subr.mxu0 0.0
    %1869 = vmatpush1.msra.mxu0 0.0
    %1870 = vmatprep.subr.mxu0 0.0
    %1871 = vmatpush1.msra.mxu0 0.0
    %1872 = vmatprep.subr.mxu0 0.0
    %1873 = vmatpush1.msra.mxu0 0.0
    %1874 = vmatprep.subr.mxu0 0.0
    %1875 = vmatpush1.msra.mxu0 0.0
    %1876 = vmatprep.subr.mxu0 0.0
    %1877 = vmatpush1.msra.mxu0 0.0
    %1878 = vmatprep.subr.mxu0 0.0
    %1879 = vmatpush1.msra.mxu0 0.0
    %1880 = vmatprep.subr.mxu0 0.0
    %1881 = vmatpush1.msra.mxu0 0.0
    %1882 = vmatprep.subr.mxu0 0.0
    %1883 = vmatpush1.msra.mxu0 0.0
    %1884 = vmatprep.subr.mxu0 0.0
    %1885 = vmatpush1.msra.mxu0 0.0
    %1886 = vmatprep.subr.mxu0 0.0
    %1887 = vmatpush1.msra.mxu0 0.0
    %1888 = vmatprep.subr.mxu0 0.0
    %1889 = vmatpush1.msra.mxu0 0.0
    %1890 = vmatprep.subr.mxu0 0.0
    %1891 = vmatpush1.msra.mxu0 0.0
    %1892 = vmatprep.subr.mxu0 0.0
    %1893 = vmatpush1.msra.mxu0 0.0
    %1894 = vmatprep.subr.mxu0 0.0
    %1895 = vmatpush1.msra.mxu0 0.0
    %1896 = vmatprep.subr.mxu0 0.0
    %1897 = vmatpush1.msra.mxu0 0.0
    %1898 = vmatprep.subr.mxu0 0.0
    %1899 = vmatpush1.msra.mxu0 0.0
    %1900 = vmatprep.subr.mxu0 0.0
    %1901 = vmatpush1.msra.mxu0 0.0
    %1902 = vmatprep.subr.mxu0 0.0
    %1903 = vmatpush1.msra.mxu0 0.0
    %1904 = vmatprep.subr.mxu0 0.0
    %1905 = vmatpush1.msra.mxu0 0.0
    %1906 = vmatprep.subr.mxu0 0.0
    %1907 = vmatpush1.msra.mxu0 0.0
    %1908 = vmatprep.subr.mxu0 0.0
    %1909 = vmatpush1.msra.mxu0 0.0
    %1910 = vmatprep.subr.mxu0 0.0
    %1911 = vmatpush1.msra.mxu0 0.0
    %1912 = vmatprep.subr.mxu0 0.0
    %1913 = vmatpush1.msra.mxu0 0.0
    %1914 = vmatprep.mubr.f32.mxu0 0.0
    %1915 = vmatmul.mubr.f32.gmra.mrb[0].mxu0 %v1848
    %v1916 = vpop.f32.mrb[0].mxu0
    %v1917 = vadd.f32 %v141, %v1916
    %v1918 = vpop.f32.mrb[0].mxu0
    %1919 = vdwg.mxu0
    %1920 = vmatprep.subr.mxu0 0.0
    %1921 = vmatpush1.msra.mxu0 %v125
    %1922 = vmatprep.subr.mxu0 0.0
    %1923 = vmatpush1.msra.mxu0 %v126
    %1924 = vmatprep.subr.mxu0 0.0
    %1925 = vmatpush1.msra.mxu0 %v127
    %1926 = vmatprep.subr.mxu0 0.0
    %1927 = vmatpush1.msra.mxu0 %v128
    %1928 = vmatprep.subr.mxu0 0.0
    %1929 = vmatpush1.msra.mxu0 0.0
    %1930 = vmatprep.subr.mxu0 0.0
    %1931 = vmatpush1.msra.mxu0 0.0
    %1932 = vmatprep.subr.mxu0 0.0
    %1933 = vmatpush1.msra.mxu0 0.0
    %1934 = vmatprep.subr.mxu0 0.0
    %1935 = vmatpush1.msra.mxu0 0.0
    %1936 = vmatprep.subr.mxu0 0.0
    %1937 = vmatpush1.msra.mxu0 0.0
    %1938 = vmatprep.subr.mxu0 0.0
    %1939 = vmatpush1.msra.mxu0 0.0
    %1940 = vmatprep.subr.mxu0 0.0
    %1941 = vmatpush1.msra.mxu0 0.0
    %1942 = vmatprep.subr.mxu0 0.0
    %1943 = vmatpush1.msra.mxu0 0.0
    %1944 = vmatprep.subr.mxu0 0.0
    %1945 = vmatpush1.msra.mxu0 0.0
    %1946 = vmatprep.subr.mxu0 0.0
    %1947 = vmatpush1.msra.mxu0 0.0
    %1948 = vmatprep.subr.mxu0 0.0
    %1949 = vmatpush1.msra.mxu0 0.0
    %1950 = vmatprep.subr.mxu0 0.0
    %1951 = vmatpush1.msra.mxu0 0.0
    %1952 = vmatprep.subr.mxu0 0.0
    %1953 = vmatpush1.msra.mxu0 0.0
    %1954 = vmatprep.subr.mxu0 0.0
    %1955 = vmatpush1.msra.mxu0 0.0
    %1956 = vmatprep.subr.mxu0 0.0
    %1957 = vmatpush1.msra.mxu0 0.0
    %1958 = vmatprep.subr.mxu0 0.0
    %1959 = vmatpush1.msra.mxu0 0.0
    %1960 = vmatprep.subr.mxu0 0.0
    %1961 = vmatpush1.msra.mxu0 0.0
    %1962 = vmatprep.subr.mxu0 0.0
    %1963 = vmatpush1.msra.mxu0 0.0
    %1964 = vmatprep.subr.mxu0 0.0
    %1965 = vmatpush1.msra.mxu0 0.0
    %1966 = vmatprep.subr.mxu0 0.0
    %1967 = vmatpush1.msra.mxu0 0.0
    %1968 = vmatprep.subr.mxu0 0.0
    %1969 = vmatpush1.msra.mxu0 0.0
    %1970 = vmatprep.subr.mxu0 0.0
    %1971 = vmatpush1.msra.mxu0 0.0
    %1972 = vmatprep.subr.mxu0 0.0
    %1973 = vmatpush1.msra.mxu0 0.0
    %1974 = vmatprep.subr.mxu0 0.0
    %1975 = vmatpush1.msra.mxu0 0.0
    %1976 = vmatprep.subr.mxu0 0.0
    %1977 = vmatpush1.msra.mxu0 0.0
    %1978 = vmatprep.subr.mxu0 0.0
    %1979 = vmatpush1.msra.mxu0 0.0
    %1980 = vmatprep.subr.mxu0 0.0
    %1981 = vmatpush1.msra.mxu0 0.0
    %1982 = vmatprep.subr.mxu0 0.0
    %1983 = vmatpush1.msra.mxu0 0.0
    %1984 = vmatprep.mubr.f32.mxu0 0.0
    %1985 = vmatmul.mubr.f32.gmra.mrb[0].mxu0 %v1848
    %v1986 = vpop.f32.mrb[0].mxu0
    %v1987 = vadd.f32 %v221, %v1986
    %v1988 = vpop.f32.mrb[0].mxu0
    %1989 = vdwg.mxu0
    %1990 = vmatprep.subr.mxu0 0.0
    %1991 = vmatpush1.msra.mxu0 %v129
    %1992 = vmatprep.subr.mxu0 0.0
    %1993 = vmatpush1.msra.mxu0 %v130
    %1994 = vmatprep.subr.mxu0 0.0
    %1995 = vmatpush1.msra.mxu0 %v131
    %1996 = vmatprep.subr.mxu0 0.0
    %1997 = vmatpush1.msra.mxu0 %v132
    %1998 = vmatprep.subr.mxu0 0.0
    %1999 = vmatpush1.msra.mxu0 0.0
    %2000 = vmatprep.subr.mxu0 0.0
    %2001 = vmatpush1.msra.mxu0 0.0
    %2002 = vmatprep.subr.mxu0 0.0
    %2003 = vmatpush1.msra.mxu0 0.0
    %2004 = vmatprep.subr.mxu0 0.0
    %2005 = vmatpush1.msra.mxu0 0.0
    %2006 = vmatprep.subr.mxu0 0.0
    %2007 = vmatpush1.msra.mxu0 0.0
    %2008 = vmatprep.subr.mxu0 0.0
    %2009 = vmatpush1.msra.mxu0 0.0
    %2010 = vmatprep.subr.mxu0 0.0
    %2011 = vmatpush1.msra.mxu0 0.0
    %2012 = vmatprep.subr.mxu0 0.0
    %2013 = vmatpush1.msra.mxu0 0.0
    %2014 = vmatprep.subr.mxu0 0.0
    %2015 = vmatpush1.msra.mxu0 0.0
    %2016 = vmatprep.subr.mxu0 0.0
    %2017 = vmatpush1.msra.mxu0 0.0
    %2018 = vmatprep.subr.mxu0 0.0
    %2019 = vmatpush1.msra.mxu0 0.0
    %2020 = vmatprep.subr.mxu0 0.0
    %2021 = vmatpush1.msra.mxu0 0.0
    %2022 = vmatprep.subr.mxu0 0.0
    %2023 = vmatpush1.msra.mxu0 0.0
    %2024 = vmatprep.subr.mxu0 0.0
    %2025 = vmatpush1.msra.mxu0 0.0
    %2026 = vmatprep.subr.mxu0 0.0
    %2027 = vmatpush1.msra.mxu0 0.0
    %2028 = vmatprep.subr.mxu0 0.0
    %2029 = vmatpush1.msra.mxu0 0.0
    %2030 = vmatprep.subr.mxu0 0.0
    %2031 = vmatpush1.msra.mxu0 0.0
    %2032 = vmatprep.subr.mxu0 0.0
    %2033 = vmatpush1.msra.mxu0 0.0
    %2034 = vmatprep.subr.mxu0 0.0
    %2035 = vmatpush1.msra.mxu0 0.0
    %2036 = vmatprep.subr.mxu0 0.0
    %2037 = vmatpush1.msra.mxu0 0.0
    %2038 = vmatprep.subr.mxu0 0.0
    %2039 = vmatpush1.msra.mxu0 0.0
    %2040 = vmatprep.subr.mxu0 0.0
    %2041 = vmatpush1.msra.mxu0 0.0
    %2042 = vmatprep.subr.mxu0 0.0
    %2043 = vmatpush1.msra.mxu0 0.0
    %2044 = vmatprep.subr.mxu0 0.0
    %2045 = vmatpush1.msra.mxu0 0.0
    %2046 = vmatprep.subr.mxu0 0.0
    %2047 = vmatpush1.msra.mxu0 0.0
    %2048 = vmatprep.subr.mxu0 0.0
    %2049 = vmatpush1.msra.mxu0 0.0
    %2050 = vmatprep.subr.mxu0 0.0
    %2051 = vmatpush1.msra.mxu0 0.0
    %2052 = vmatprep.subr.mxu0 0.0
    %2053 = vmatpush1.msra.mxu0 0.0
    %2054 = vmatprep.mubr.f32.mxu0 0.0
    %2055 = vmatmul.mubr.f32.gmra.mrb[0].mxu0 %v1848
    %v2056 = vpop.f32.mrb[0].mxu0
    %v2057 = vadd.f32 %v297, %v2056
    %v2058 = vpop.f32.mrb[0].mxu0
    %2059 = vdwg.mxu0
    %s2060 = scalar_lea.vmem [#allocation3], 28
    %v2061 = vld [vmem:[%s2060] sm:$0xf]
    %v2062 = vadd.f32 %v2061, %v1917
    %v2063 = vxor.u32 %v2062, 2147483648
    %v2064 = vmul.f32 %v2063, 1.442695
    %v2065 = vpow.pop %v2064
    %v2066 = vadd.f32 %v2065, 1.0
    %v2067 = vrcp.pop %v2066
    %v2068 = vmul.f32 1.0, %v2067
    %s2069 = scalar_lea.vmem [#allocation6], 28
    %v2070 = vld [vmem:[%s2069] sm:$0xf]
    %v2071 = vadd.f32 %v2070, %v1987
    %v2072 = vxor.u32 %v2071, 2147483648
    %v2073 = vmul.f32 %v2072, 1.442695
    %v2074 = vpow.pop %v2073
    %v2075 = vadd.f32 %v2074, 1.0
    %v2076 = vrcp.pop %v2075
    %v2077 = vmul.f32 1.0, %v2076
    %s2078 = scalar_lea.vmem [#allocation8], 28
    %v2079 = vld [vmem:[%s2078] sm:$0xf]
    %v2080 = vmul.f32 %v2068, %v2057
    %v2081 = vadd.f32 %v2079, %v2080
    %v2082 = vtanh.pop %v2081
    %v2083 = vsub.f32 1.0, %v2077
    %v2084 = vmul.f32 %v2083, %v2082
    %v2085 = vmul.f32 %v2077, %v1844
    %v2086 = vadd.f32 %v2084, %v2085
    %s2087 = scalar_lea.vmem [#allocation14], 28
    %2088 = vst.msk [vmem:[%s2087] sm:$0xf] %vm393, %v2086
    %2089 = vst.msk [vmem:[#allocation2] sm:$0xf] %vm393, %v2086
    // Predicated region
    $region66: #{tpu_custom_call.1} parent=1 // pred_check
      _
    $region67: #{tpu_custom_call.1} parent=1 // pred_check_branch
      %2091 = sbr.rel (0) target = $region69
    $region68: #{tpu_custom_call.1} parent=1 // pred_region
      %s2093 = ssub.s32 512, 512
      %2094 = vsyncadd [#allocation5], %s2093
      %s2095 = sshll.u32 [#allocation14], 4
      %s2096 = int_to_ptr.vmem [resolvable:$true] %s2095
      %2101 = dma.vmem_to_hbm [thread:$0]  %s2096, 512, %s9, [#allocation5], 64, 64, 4
    $region69: #{tpu_custom_call.1} parent=1 // pred_fallthru
      _
    // Predicated region
    $region70: #{tpu_custom_call.1} parent=1 // pred_check
      _
    $region71: #{tpu_custom_call.1} parent=1 // pred_check_branch
      %2103 = sbr.rel (0) target = $region73
    $region72: #{tpu_custom_call.1} parent=1 // pred_region
      %2104 = dma.done [#allocation5], 512
    $region73: #{tpu_custom_call.1} parent=1 // pred_fallthru
      _
    %2105 = vsyncpa [#allocation4], 1
    %2106 = vsyncpa [#allocation7], 1
    %2107 = vsyncpa [#allocation10], 1
    %2108 = vsyncpa [#allocation13], 1
    %2109 = vsyncpa [#allocation5], 1

</llo_original>
